<compile_context>
chip_gen: v7x
topology: tpu7x:2x2x1
jax: 0.10.0
libtpu: 0.0.40
codegen_flags: <defaults>
</compile_context>

<pallas_src>
import functools

import jax
import jax.numpy as jnp
import numpy as np
from jax.experimental import pallas as pl
from jax.experimental.pallas import tpu as pltpu

INPUT_SIZE = 19
HIDDEN_SIZE = 32
NUM_LAYERS = 2
OUT_SIZE = 4

# ----------------------------------------------------------------------------
# Weight-slab layout (rows; all starts 8-aligned, 256 lanes wide, f32)
# ----------------------------------------------------------------------------
_R_WIH0 = 0     # rows [0:19)   lanes [0:128)  : Wih0^T (gate-reordered)
_R_B0 = 24      # row  24       lanes [0:128)  : b_ih0 + b_hh0 (reordered)
_R_WBLK = 32    # rows [32:96)  lanes [0:256)  : fused block weight (2H, 8H)
_R_B1 = 96      # row  96       lanes [0:128)  : b_ih1 + b_hh1 (reordered)
_R_WOUT = 104   # rows [104:136) lanes [0:4)   : Wout^T (rest of lanes zero)
_R_BOUT = 136   # row  136      lanes [0:4)    : b_out
_SLAB_ROWS = 144
_SLAB_LANES = 256


# -----------------------------------------------------------------------------
# Kernel
# -----------------------------------------------------------------------------
def _lstm_kernel(x_ref, slab_ref, out_ref, *, batch, seq):
    """x_ref: (T*B, I) time-major-flattened input; slab_ref: packed weights."""
    B, T = batch, seq
    H = HIDDEN_SIZE
    I = INPUT_SIZE

    # ---- unpack the weight slab (static, 8/128-aligned slices) ----
    wih0 = slab_ref[_R_WIH0:_R_WIH0 + I, 0:4 * H]          # (I, 4H)
    b0 = slab_ref[_R_B0:_R_B0 + 1, 0:4 * H]                # (1, 4H)
    w_blk = slab_ref[_R_WBLK:_R_WBLK + 2 * H, :]           # (2H, 8H)
    b1 = slab_ref[_R_B1:_R_B1 + 1, 0:4 * H]                # (1, 4H)
    wout = slab_ref[_R_WOUT:_R_WOUT + H, 0:4 * H]          # (H, 128) zero-padded
    bout = slab_ref[_R_BOUT:_R_BOUT + 1, 0:4 * H]          # (1, 128) zero-padded

    # ---- hoisted layer-0 input projection: one big MXU pass, T-major layout ----
    xg = (jnp.dot(x_ref[...], wih0, preferred_element_type=jnp.float32) + b0)
    xg = xg.reshape(T, B, 4 * H)          # xg[t] is a free leading-dim select

    # hoisted broadcast (JAX does not CSE broadcast_in_dim inside the loop)
    b1b = jnp.broadcast_to(b1, (B, 4 * H))

    def cell(g, c):
        # packed gate order [i | f | o | g]: one sigmoid over 3H contiguous
        # lanes, tanh on the last H lanes, tanh on the new cell state.
        s = jax.nn.sigmoid(g[:, :3 * H])
        i_g = s[:, 0 * H:1 * H]
        f_g = s[:, 1 * H:2 * H]
        o_g = s[:, 2 * H:3 * H]
        c_new = f_g * c + i_g * jnp.tanh(g[:, 3 * H:])
        return o_g * jnp.tanh(c_new), c_new

    zeros = jnp.zeros((B, H), jnp.float32)
    # Prologue: layer-0 at t=0 (h0(-1) = c0(-1) = 0 -> no recurrent term).
    h0, c0 = cell(xg[0], zeros)
    h1, c1 = zeros, zeros

    # Skewed recurrence, fully unrolled (T static):
    #   fused[:, :4H]  = layer-1 gates at step t     (from h0(t), h1(t-1))
    #   fused[:, 4H:]  = layer-0 recurrent gates at step t+1 (from h0(t))
    # One dependent MXU push/pop per step instead of two.
    # TODO(synk): nn.LSTM dropout=0.05 between layers is training-mode only;
    # eval-mode (identity) semantics implemented here.
    for t in range(T):
        fused = jnp.dot(jnp.concatenate([h0, h1], axis=-1), w_blk,
                        preferred_element_type=jnp.float32)      # (B, 8H)
        h1, c1 = cell(fused[:, :4 * H] + b1b, c1)                # layer-1, step t
        if t + 1 < T:
            h0, c0 = cell(fused[:, 4 * H:] + xg[t + 1], c0)      # layer-0, step t+1

    # out = Linear(HIDDEN, OUT) on l_out[:, -1, :] == h1(T-1)
    out = jnp.dot(h1, wout, preferred_element_type=jnp.float32) + bout
    out_ref[...] = out[:, :OUT_SIZE]


# -----------------------------------------------------------------------------
# Wrapper
# -----------------------------------------------------------------------------
def discharge_net_forward(x_btI, weight_slab):
    """x_btI: (B, T, INPUT_SIZE) float32 (batch_first, like PyTorch)."""
    B, T, I = x_btI.shape
    # Time-major flatten on the XLA side (tiny); lets the kernel lay xg out
    # T-major so per-step indexing is a free leading-dim select.
    x_tb = jnp.transpose(x_btI, (1, 0, 2)).reshape(T * B, I)
    vmem = pl.BlockSpec(memory_space=pltpu.MemorySpace.VMEM)
    kern = functools.partial(_lstm_kernel, batch=B, seq=T)
    # TODO(synk): for realistic batch (B >= 16) on v7x, add a batch grid with
    # dimension_semantics=("parallel",) to engage the second TensorCore.
    return pl.pallas_call(
        kern,
        out_shape=jax.ShapeDtypeStruct((B, OUT_SIZE), jnp.float32),
        in_specs=[vmem, vmem],
        out_specs=vmem,
    )(x_tb, weight_slab)


# -----------------------------------------------------------------------------
# Parameters (PyTorch-shaped) and kernel-layout packing
# -----------------------------------------------------------------------------
def init_torch_params(key):
    """PyTorch-style uniform(-1/sqrt(H), 1/sqrt(H)) init, PyTorch shapes."""
    H, I, O = HIDDEN_SIZE, INPUT_SIZE, OUT_SIZE
    bound = 1.0 / np.sqrt(H)
    ks = jax.random.split(key, 10)

    def u(k, shape):
        return jax.random.uniform(k, shape, jnp.float32, -bound, bound)

    return {
        "w_ih0": u(ks[0], (4 * H, I)), "w_hh0": u(ks[1], (4 * H, H)),
        "b_ih0": u(ks[2], (4 * H,)),   "b_hh0": u(ks[3], (4 * H,)),
        "w_ih1": u(ks[4], (4 * H, H)), "w_hh1": u(ks[5], (4 * H, H)),
        "b_ih1": u(ks[6], (4 * H,)),   "b_hh1": u(ks[7], (4 * H,)),
        "w_out": u(ks[8], (O, H)),     "b_out": u(ks[9], (O,)),
    }


def pack_params(p):
    """Pack all weights into one (144, 256) f32 slab.

    - gate columns reordered from PyTorch (i,f,g,o) to (i,f,o,g)
    - layer-0 bias fused (b_ih0 + b_hh0), layer-1 bias fused (b_ih1 + b_hh1)
    - fused block weight for the skewed recurrence, LHS = [h0(t), h1(t-1)]:
        cols [0:4H)  -> layer-1 gates at step t     (Wih1^T / Whh1^T)
        cols [4H:8H) -> layer-0 gates at step t+1   (Whh0^T / 0)
    """
    H, I, O = HIDDEN_SIZE, INPUT_SIZE, OUT_SIZE
    perm = np.concatenate([np.arange(0, H), np.arange(H, 2 * H),
                           np.arange(3 * H, 4 * H), np.arange(2 * H, 3 * H)])

    def rg(w):  # reorder the 4H (gate) axis, which is axis 0 in PyTorch layout
        return np.asarray(w)[perm]

    wih0 = rg(p["w_ih0"]).T                     # (I, 4H)
    whh0 = rg(p["w_hh0"]).T                     # (H, 4H)
    b0 = rg(p["b_ih0"] + p["b_hh0"])            # (4H,)
    wih1 = rg(p["w_ih1"]).T                     # (H, 4H)
    whh1 = rg(p["w_hh1"]).T                     # (H, 4H)
    b1 = rg(p["b_ih1"] + p["b_hh1"])            # (4H,)
    wout = np.asarray(p["w_out"]).T             # (H, O)
    bout = np.asarray(p["b_out"])               # (O,)

    slab = np.zeros((_SLAB_ROWS, _SLAB_LANES), np.float32)
    slab[_R_WIH0:_R_WIH0 + I, 0:4 * H] = wih0
    slab[_R_B0, 0:4 * H] = b0
    slab[_R_WBLK:_R_WBLK + H, 0:4 * H] = wih1          # h0 -> layer-1 gates
    slab[_R_WBLK:_R_WBLK + H, 4 * H:8 * H] = whh0      # h0 -> layer-0 next gates
    slab[_R_WBLK + H:_R_WBLK + 2 * H, 0:4 * H] = whh1  # h1 -> layer-1 gates
    # (h1 -> layer-0 block stays zero)
    slab[_R_B1, 0:4 * H] = b1
    slab[_R_WOUT:_R_WOUT + H, 0:O] = wout
    slab[_R_BOUT, 0:O] = bout
    return jnp.asarray(slab)


# -----------------------------------------------------------------------------
# Pure-JAX reference (faithful per-step PyTorch LSTM math, unfused weights)
# -----------------------------------------------------------------------------
def reference_forward(x_btI, p):
    H = HIDDEN_SIZE
    B, T, I = x_btI.shape

    def cell(x_t, h, c, wih, whh, b):
        g = x_t @ wih.T + h @ whh.T + b
        i_g = jax.nn.sigmoid(g[:, 0 * H:1 * H])
        f_g = jax.nn.sigmoid(g[:, 1 * H:2 * H])
        g_g = jnp.tanh(g[:, 2 * H:3 * H])
        o_g = jax.nn.sigmoid(g[:, 3 * H:4 * H])
        c_new = f_g * c + i_g * g_g
        return o_g * jnp.tanh(c_new), c_new

    h0 = c0 = h1 = c1 = jnp.zeros((B, H), jnp.float32)
    b0 = p["b_ih0"] + p["b_hh0"]
    b1 = p["b_ih1"] + p["b_hh1"]
    for t in range(T):
        x_t = x_btI[:, t, :]
        h0, c0 = cell(x_t, h0, c0, p["w_ih0"], p["w_hh0"], b0)
        h1, c1 = cell(h0, h1, c1, p["w_ih1"], p["w_hh1"], b1)
    return h1 @ p["w_out"].T + p["b_out"]


if __name__ == "__main__":
    key = jax.random.PRNGKey(0)
    k_x, k_p = jax.random.split(key)

    B, T = 2, 8
    x = jax.random.normal(k_x, (B, T, INPUT_SIZE), jnp.float32)
    torch_params = init_torch_params(k_p)
    weight_slab = pack_params(torch_params)

    out = discharge_net_forward(x, weight_slab)
    out = jax.block_until_ready(out)

    ref = reference_forward(x, torch_params)
    assert out.shape == (B, OUT_SIZE)
    np.testing.assert_allclose(np.asarray(out), np.asarray(ref),
                               rtol=1e-4, atol=1e-4)
    print("KERNEL_OK")
</pallas_src>

<mosaic_0001>
module attributes {stable_mosaic.version = 11 : i64} {
  func.func @_lstm_kernel(%arg0: memref<16x19xf32, #tpu.memory_space<vmem>>, %arg1: memref<144x256xf32, #tpu.memory_space<vmem>>, %arg2: memref<2x4xf32, #tpu.memory_space<vmem>>) attributes {dimension_semantics = [], scalar_prefetch = 0 : i64, scratch_operands = 0 : i64, tpu.core_type = #tpu.core_type<tc>} {
    %c0 = arith.constant 0 : index
    %c0_0 = arith.constant 0 : index
    %0 = vector.load %arg1[%c0, %c0_0] : memref<144x256xf32, #tpu.memory_space<vmem>>, vector<19x128xf32>
    %c24 = arith.constant 24 : index
    %c0_1 = arith.constant 0 : index
    %1 = vector.load %arg1[%c24, %c0_1] : memref<144x256xf32, #tpu.memory_space<vmem>>, vector<1x128xf32>
    %c32 = arith.constant 32 : index
    %c0_2 = arith.constant 0 : index
    %2 = vector.load %arg1[%c32, %c0_2] : memref<144x256xf32, #tpu.memory_space<vmem>>, vector<64x256xf32>
    %c96 = arith.constant 96 : index
    %c0_3 = arith.constant 0 : index
    %3 = vector.load %arg1[%c96, %c0_3] : memref<144x256xf32, #tpu.memory_space<vmem>>, vector<1x128xf32>
    %c104 = arith.constant 104 : index
    %c0_4 = arith.constant 0 : index
    %4 = vector.load %arg1[%c104, %c0_4] : memref<144x256xf32, #tpu.memory_space<vmem>>, vector<32x128xf32>
    %c136 = arith.constant 136 : index
    %c0_5 = arith.constant 0 : index
    %5 = vector.load %arg1[%c136, %c0_5] : memref<144x256xf32, #tpu.memory_space<vmem>>, vector<1x128xf32>
    %c0_6 = arith.constant 0 : index
    %c0_7 = arith.constant 0 : index
    %6 = vector.load %arg0[%c0_6, %c0_7] : memref<16x19xf32, #tpu.memory_space<vmem>>, vector<16x19xf32>
    %cst = arith.constant dense<0.000000e+00> : vector<16x128xf32>
    %7 = tpu.matmul %6, %0, %cst {dimension_numbers = #tpu.dot_dimension_numbers<[1], [0], [0], [1], [0, 0, 1, 1], [], []>} : vector<16x19xf32>, vector<19x128xf32>, vector<16x128xf32> -> vector<16x128xf32>
    %8 = vector.broadcast %1 : vector<1x128xf32> to vector<16x128xf32>
    %9 = arith.addf %7, %8 : vector<16x128xf32>
    %10 = vector.shape_cast %9 : vector<16x128xf32> to vector<8x2x128xf32>
    %11 = vector.shape_cast %3 : vector<1x128xf32> to vector<1x128xf32>
    %12 = vector.broadcast %11 : vector<1x128xf32> to vector<2x128xf32>
    %cst_8 = arith.constant 0.000000e+00 : f32
    %13 = vector.broadcast %cst_8 : f32 to vector<2x32xf32>
    %14 = vector.extract_strided_slice %10 {offsets = [0, 0, 0], sizes = [1, 2, 128], strides = [1, 1, 1]} : vector<8x2x128xf32> to vector<1x2x128xf32>
    %15 = vector.shape_cast %14 : vector<1x2x128xf32> to vector<2x128xf32>
    %16 = vector.extract_strided_slice %15 {offsets = [0, 0], sizes = [2, 96], strides = [1, 1]} : vector<2x128xf32> to vector<2x96xf32>
    %17 = arith.negf %16 : vector<2x96xf32>
    %18 = math.exp %17 : vector<2x96xf32>
    %cst_9 = arith.constant 1.000000e+00 : f32
    %19 = vector.broadcast %cst_9 : f32 to vector<2x96xf32>
    %20 = arith.addf %19, %18 : vector<2x96xf32>
    %21 = arith.divf %19, %20 : vector<2x96xf32>
    %22 = vector.extract_strided_slice %21 {offsets = [0, 0], sizes = [2, 32], strides = [1, 1]} : vector<2x96xf32> to vector<2x32xf32>
    %23 = vector.extract_strided_slice %21 {offsets = [0, 32], sizes = [2, 32], strides = [1, 1]} : vector<2x96xf32> to vector<2x32xf32>
    %24 = vector.extract_strided_slice %21 {offsets = [0, 64], sizes = [2, 32], strides = [1, 1]} : vector<2x96xf32> to vector<2x32xf32>
    %25 = arith.mulf %23, %13 : vector<2x32xf32>
    %26 = vector.extract_strided_slice %15 {offsets = [0, 96], sizes = [2, 32], strides = [1, 1]} : vector<2x128xf32> to vector<2x32xf32>
    %27 = math.tanh %26 : vector<2x32xf32>
    %28 = arith.mulf %22, %27 : vector<2x32xf32>
    %29 = arith.addf %25, %28 : vector<2x32xf32>
    %30 = math.tanh %29 : vector<2x32xf32>
    %31 = arith.mulf %24, %30 : vector<2x32xf32>
    %32 = tpu.concatenate %31, %13 in 1 : vector<2x32xf32>, vector<2x32xf32> -> vector<2x64xf32>
    %cst_10 = arith.constant dense<0.000000e+00> : vector<2x256xf32>
    %33 = tpu.matmul %32, %2, %cst_10 {dimension_numbers = #tpu.dot_dimension_numbers<[1], [0], [0], [1], [0, 0, 1, 1], [], []>} : vector<2x64xf32>, vector<64x256xf32>, vector<2x256xf32> -> vector<2x256xf32>
    %34 = vector.extract_strided_slice %33 {offsets = [0, 0], sizes = [2, 128], strides = [1, 1]} : vector<2x256xf32> to vector<2x128xf32>
    %35 = arith.addf %34, %12 : vector<2x128xf32>
    %36 = vector.extract_strided_slice %35 {offsets = [0, 0], sizes = [2, 96], strides = [1, 1]} : vector<2x128xf32> to vector<2x96xf32>
    %37 = arith.negf %36 : vector<2x96xf32>
    %38 = math.exp %37 : vector<2x96xf32>
    %cst_11 = arith.constant 1.000000e+00 : f32
    %39 = vector.broadcast %cst_11 : f32 to vector<2x96xf32>
    %40 = arith.addf %39, %38 : vector<2x96xf32>
    %41 = arith.divf %39, %40 : vector<2x96xf32>
    %42 = vector.extract_strided_slice %41 {offsets = [0, 0], sizes = [2, 32], strides = [1, 1]} : vector<2x96xf32> to vector<2x32xf32>
    %43 = vector.extract_strided_slice %41 {offsets = [0, 32], sizes = [2, 32], strides = [1, 1]} : vector<2x96xf32> to vector<2x32xf32>
    %44 = vector.extract_strided_slice %41 {offsets = [0, 64], sizes = [2, 32], strides = [1, 1]} : vector<2x96xf32> to vector<2x32xf32>
    %45 = arith.mulf %43, %13 : vector<2x32xf32>
    %46 = vector.extract_strided_slice %35 {offsets = [0, 96], sizes = [2, 32], strides = [1, 1]} : vector<2x128xf32> to vector<2x32xf32>
    %47 = math.tanh %46 : vector<2x32xf32>
    %48 = arith.mulf %42, %47 : vector<2x32xf32>
    %49 = arith.addf %45, %48 : vector<2x32xf32>
    %50 = math.tanh %49 : vector<2x32xf32>
    %51 = arith.mulf %44, %50 : vector<2x32xf32>
    %52 = vector.extract_strided_slice %33 {offsets = [0, 128], sizes = [2, 128], strides = [1, 1]} : vector<2x256xf32> to vector<2x128xf32>
    %53 = vector.extract_strided_slice %10 {offsets = [1, 0, 0], sizes = [1, 2, 128], strides = [1, 1, 1]} : vector<8x2x128xf32> to vector<1x2x128xf32>
    %54 = vector.shape_cast %53 : vector<1x2x128xf32> to vector<2x128xf32>
    %55 = arith.addf %52, %54 : vector<2x128xf32>
    %56 = vector.extract_strided_slice %55 {offsets = [0, 0], sizes = [2, 96], strides = [1, 1]} : vector<2x128xf32> to vector<2x96xf32>
    %57 = arith.negf %56 : vector<2x96xf32>
    %58 = math.exp %57 : vector<2x96xf32>
    %cst_12 = arith.constant 1.000000e+00 : f32
    %59 = vector.broadcast %cst_12 : f32 to vector<2x96xf32>
    %60 = arith.addf %59, %58 : vector<2x96xf32>
    %61 = arith.divf %59, %60 : vector<2x96xf32>
    %62 = vector.extract_strided_slice %61 {offsets = [0, 0], sizes = [2, 32], strides = [1, 1]} : vector<2x96xf32> to vector<2x32xf32>
    %63 = vector.extract_strided_slice %61 {offsets = [0, 32], sizes = [2, 32], strides = [1, 1]} : vector<2x96xf32> to vector<2x32xf32>
    %64 = vector.extract_strided_slice %61 {offsets = [0, 64], sizes = [2, 32], strides = [1, 1]} : vector<2x96xf32> to vector<2x32xf32>
    %65 = arith.mulf %63, %29 : vector<2x32xf32>
    %66 = vector.extract_strided_slice %55 {offsets = [0, 96], sizes = [2, 32], strides = [1, 1]} : vector<2x128xf32> to vector<2x32xf32>
    %67 = math.tanh %66 : vector<2x32xf32>
    %68 = arith.mulf %62, %67 : vector<2x32xf32>
    %69 = arith.addf %65, %68 : vector<2x32xf32>
    %70 = math.tanh %69 : vector<2x32xf32>
    %71 = arith.mulf %64, %70 : vector<2x32xf32>
    %72 = tpu.concatenate %71, %51 in 1 : vector<2x32xf32>, vector<2x32xf32> -> vector<2x64xf32>
    %cst_13 = arith.constant dense<0.000000e+00> : vector<2x256xf32>
    %73 = tpu.matmul %72, %2, %cst_13 {dimension_numbers = #tpu.dot_dimension_numbers<[1], [0], [0], [1], [0, 0, 1, 1], [], []>} : vector<2x64xf32>, vector<64x256xf32>, vector<2x256xf32> -> vector<2x256xf32>
    %74 = vector.extract_strided_slice %73 {offsets = [0, 0], sizes = [2, 128], strides = [1, 1]} : vector<2x256xf32> to vector<2x128xf32>
    %75 = arith.addf %74, %12 : vector<2x128xf32>
    %76 = vector.extract_strided_slice %75 {offsets = [0, 0], sizes = [2, 96], strides = [1, 1]} : vector<2x128xf32> to vector<2x96xf32>
    %77 = arith.negf %76 : vector<2x96xf32>
    %78 = math.exp %77 : vector<2x96xf32>
    %cst_14 = arith.constant 1.000000e+00 : f32
    %79 = vector.broadcast %cst_14 : f32 to vector<2x96xf32>
    %80 = arith.addf %79, %78 : vector<2x96xf32>
    %81 = arith.divf %79, %80 : vector<2x96xf32>
    %82 = vector.extract_strided_slice %81 {offsets = [0, 0], sizes = [2, 32], strides = [1, 1]} : vector<2x96xf32> to vector<2x32xf32>
    %83 = vector.extract_strided_slice %81 {offsets = [0, 32], sizes = [2, 32], strides = [1, 1]} : vector<2x96xf32> to vector<2x32xf32>
    %84 = vector.extract_strided_slice %81 {offsets = [0, 64], sizes = [2, 32], strides = [1, 1]} : vector<2x96xf32> to vector<2x32xf32>
    %85 = arith.mulf %83, %49 : vector<2x32xf32>
    %86 = vector.extract_strided_slice %75 {offsets = [0, 96], sizes = [2, 32], strides = [1, 1]} : vector<2x128xf32> to vector<2x32xf32>
    %87 = math.tanh %86 : vector<2x32xf32>
    %88 = arith.mulf %82, %87 : vector<2x32xf32>
    %89 = arith.addf %85, %88 : vector<2x32xf32>
    %90 = math.tanh %89 : vector<2x32xf32>
    %91 = arith.mulf %84, %90 : vector<2x32xf32>
    %92 = vector.extract_strided_slice %73 {offsets = [0, 128], sizes = [2, 128], strides = [1, 1]} : vector<2x256xf32> to vector<2x128xf32>
    %93 = vector.extract_strided_slice %10 {offsets = [2, 0, 0], sizes = [1, 2, 128], strides = [1, 1, 1]} : vector<8x2x128xf32> to vector<1x2x128xf32>
    %94 = vector.shape_cast %93 : vector<1x2x128xf32> to vector<2x128xf32>
    %95 = arith.addf %92, %94 : vector<2x128xf32>
    %96 = vector.extract_strided_slice %95 {offsets = [0, 0], sizes = [2, 96], strides = [1, 1]} : vector<2x128xf32> to vector<2x96xf32>
    %97 = arith.negf %96 : vector<2x96xf32>
    %98 = math.exp %97 : vector<2x96xf32>
    %cst_15 = arith.constant 1.000000e+00 : f32
    %99 = vector.broadcast %cst_15 : f32 to vector<2x96xf32>
    %100 = arith.addf %99, %98 : vector<2x96xf32>
    %101 = arith.divf %99, %100 : vector<2x96xf32>
    %102 = vector.extract_strided_slice %101 {offsets = [0, 0], sizes = [2, 32], strides = [1, 1]} : vector<2x96xf32> to vector<2x32xf32>
    %103 = vector.extract_strided_slice %101 {offsets = [0, 32], sizes = [2, 32], strides = [1, 1]} : vector<2x96xf32> to vector<2x32xf32>
    %104 = vector.extract_strided_slice %101 {offsets = [0, 64], sizes = [2, 32], strides = [1, 1]} : vector<2x96xf32> to vector<2x32xf32>
    %105 = arith.mulf %103, %69 : vector<2x32xf32>
    %106 = vector.extract_strided_slice %95 {offsets = [0, 96], sizes = [2, 32], strides = [1, 1]} : vector<2x128xf32> to vector<2x32xf32>
    %107 = math.tanh %106 : vector<2x32xf32>
    %108 = arith.mulf %102, %107 : vector<2x32xf32>
    %109 = arith.addf %105, %108 : vector<2x32xf32>
    %110 = math.tanh %109 : vector<2x32xf32>
    %111 = arith.mulf %104, %110 : vector<2x32xf32>
    %112 = tpu.concatenate %111, %91 in 1 : vector<2x32xf32>, vector<2x32xf32> -> vector<2x64xf32>
    %cst_16 = arith.constant dense<0.000000e+00> : vector<2x256xf32>
    %113 = tpu.matmul %112, %2, %cst_16 {dimension_numbers = #tpu.dot_dimension_numbers<[1], [0], [0], [1], [0, 0, 1, 1], [], []>} : vector<2x64xf32>, vector<64x256xf32>, vector<2x256xf32> -> vector<2x256xf32>
    %114 = vector.extract_strided_slice %113 {offsets = [0, 0], sizes = [2, 128], strides = [1, 1]} : vector<2x256xf32> to vector<2x128xf32>
    %115 = arith.addf %114, %12 : vector<2x128xf32>
    %116 = vector.extract_strided_slice %115 {offsets = [0, 0], sizes = [2, 96], strides = [1, 1]} : vector<2x128xf32> to vector<2x96xf32>
    %117 = arith.negf %116 : vector<2x96xf32>
    %118 = math.exp %117 : vector<2x96xf32>
    %cst_17 = arith.constant 1.000000e+00 : f32
    %119 = vector.broadcast %cst_17 : f32 to vector<2x96xf32>
    %120 = arith.addf %119, %118 : vector<2x96xf32>
    %121 = arith.divf %119, %120 : vector<2x96xf32>
    %122 = vector.extract_strided_slice %121 {offsets = [0, 0], sizes = [2, 32], strides = [1, 1]} : vector<2x96xf32> to vector<2x32xf32>
    %123 = vector.extract_strided_slice %121 {offsets = [0, 32], sizes = [2, 32], strides = [1, 1]} : vector<2x96xf32> to vector<2x32xf32>
    %124 = vector.extract_strided_slice %121 {offsets = [0, 64], sizes = [2, 32], strides = [1, 1]} : vector<2x96xf32> to vector<2x32xf32>
    %125 = arith.mulf %123, %89 : vector<2x32xf32>
    %126 = vector.extract_strided_slice %115 {offsets = [0, 96], sizes = [2, 32], strides = [1, 1]} : vector<2x128xf32> to vector<2x32xf32>
    %127 = math.tanh %126 : vector<2x32xf32>
    %128 = arith.mulf %122, %127 : vector<2x32xf32>
    %129 = arith.addf %125, %128 : vector<2x32xf32>
    %130 = math.tanh %129 : vector<2x32xf32>
    %131 = arith.mulf %124, %130 : vector<2x32xf32>
    %132 = vector.extract_strided_slice %113 {offsets = [0, 128], sizes = [2, 128], strides = [1, 1]} : vector<2x256xf32> to vector<2x128xf32>
    %133 = vector.extract_strided_slice %10 {offsets = [3, 0, 0], sizes = [1, 2, 128], strides = [1, 1, 1]} : vector<8x2x128xf32> to vector<1x2x128xf32>
    %134 = vector.shape_cast %133 : vector<1x2x128xf32> to vector<2x128xf32>
    %135 = arith.addf %132, %134 : vector<2x128xf32>
    %136 = vector.extract_strided_slice %135 {offsets = [0, 0], sizes = [2, 96], strides = [1, 1]} : vector<2x128xf32> to vector<2x96xf32>
    %137 = arith.negf %136 : vector<2x96xf32>
    %138 = math.exp %137 : vector<2x96xf32>
    %cst_18 = arith.constant 1.000000e+00 : f32
    %139 = vector.broadcast %cst_18 : f32 to vector<2x96xf32>
    %140 = arith.addf %139, %138 : vector<2x96xf32>
    %141 = arith.divf %139, %140 : vector<2x96xf32>
    %142 = vector.extract_strided_slice %141 {offsets = [0, 0], sizes = [2, 32], strides = [1, 1]} : vector<2x96xf32> to vector<2x32xf32>
    %143 = vector.extract_strided_slice %141 {offsets = [0, 32], sizes = [2, 32], strides = [1, 1]} : vector<2x96xf32> to vector<2x32xf32>
    %144 = vector.extract_strided_slice %141 {offsets = [0, 64], sizes = [2, 32], strides = [1, 1]} : vector<2x96xf32> to vector<2x32xf32>
    %145 = arith.mulf %143, %109 : vector<2x32xf32>
    %146 = vector.extract_strided_slice %135 {offsets = [0, 96], sizes = [2, 32], strides = [1, 1]} : vector<2x128xf32> to vector<2x32xf32>
    %147 = math.tanh %146 : vector<2x32xf32>
    %148 = arith.mulf %142, %147 : vector<2x32xf32>
    %149 = arith.addf %145, %148 : vector<2x32xf32>
    %150 = math.tanh %149 : vector<2x32xf32>
    %151 = arith.mulf %144, %150 : vector<2x32xf32>
    %152 = tpu.concatenate %151, %131 in 1 : vector<2x32xf32>, vector<2x32xf32> -> vector<2x64xf32>
    %cst_19 = arith.constant dense<0.000000e+00> : vector<2x256xf32>
    %153 = tpu.matmul %152, %2, %cst_19 {dimension_numbers = #tpu.dot_dimension_numbers<[1], [0], [0], [1], [0, 0, 1, 1], [], []>} : vector<2x64xf32>, vector<64x256xf32>, vector<2x256xf32> -> vector<2x256xf32>
    %154 = vector.extract_strided_slice %153 {offsets = [0, 0], sizes = [2, 128], strides = [1, 1]} : vector<2x256xf32> to vector<2x128xf32>
    %155 = arith.addf %154, %12 : vector<2x128xf32>
    %156 = vector.extract_strided_slice %155 {offsets = [0, 0], sizes = [2, 96], strides = [1, 1]} : vector<2x128xf32> to vector<2x96xf32>
    %157 = arith.negf %156 : vector<2x96xf32>
    %158 = math.exp %157 : vector<2x96xf32>
    %cst_20 = arith.constant 1.000000e+00 : f32
    %159 = vector.broadcast %cst_20 : f32 to vector<2x96xf32>
    %160 = arith.addf %159, %158 : vector<2x96xf32>
    %161 = arith.divf %159, %160 : vector<2x96xf32>
    %162 = vector.extract_strided_slice %161 {offsets = [0, 0], sizes = [2, 32], strides = [1, 1]} : vector<2x96xf32> to vector<2x32xf32>
    %163 = vector.extract_strided_slice %161 {offsets = [0, 32], sizes = [2, 32], strides = [1, 1]} : vector<2x96xf32> to vector<2x32xf32>
    %164 = vector.extract_strided_slice %161 {offsets = [0, 64], sizes = [2, 32], strides = [1, 1]} : vector<2x96xf32> to vector<2x32xf32>
    %165 = arith.mulf %163, %129 : vector<2x32xf32>
    %166 = vector.extract_strided_slice %155 {offsets = [0, 96], sizes = [2, 32], strides = [1, 1]} : vector<2x128xf32> to vector<2x32xf32>
    %167 = math.tanh %166 : vector<2x32xf32>
    %168 = arith.mulf %162, %167 : vector<2x32xf32>
    %169 = arith.addf %165, %168 : vector<2x32xf32>
    %170 = math.tanh %169 : vector<2x32xf32>
    %171 = arith.mulf %164, %170 : vector<2x32xf32>
    %172 = vector.extract_strided_slice %153 {offsets = [0, 128], sizes = [2, 128], strides = [1, 1]} : vector<2x256xf32> to vector<2x128xf32>
    %173 = vector.extract_strided_slice %10 {offsets = [4, 0, 0], sizes = [1, 2, 128], strides = [1, 1, 1]} : vector<8x2x128xf32> to vector<1x2x128xf32>
    %174 = vector.shape_cast %173 : vector<1x2x128xf32> to vector<2x128xf32>
    %175 = arith.addf %172, %174 : vector<2x128xf32>
    %176 = vector.extract_strided_slice %175 {offsets = [0, 0], sizes = [2, 96], strides = [1, 1]} : vector<2x128xf32> to vector<2x96xf32>
    %177 = arith.negf %176 : vector<2x96xf32>
    %178 = math.exp %177 : vector<2x96xf32>
    %cst_21 = arith.constant 1.000000e+00 : f32
    %179 = vector.broadcast %cst_21 : f32 to vector<2x96xf32>
    %180 = arith.addf %179, %178 : vector<2x96xf32>
    %181 = arith.divf %179, %180 : vector<2x96xf32>
    %182 = vector.extract_strided_slice %181 {offsets = [0, 0], sizes = [2, 32], strides = [1, 1]} : vector<2x96xf32> to vector<2x32xf32>
    %183 = vector.extract_strided_slice %181 {offsets = [0, 32], sizes = [2, 32], strides = [1, 1]} : vector<2x96xf32> to vector<2x32xf32>
    %184 = vector.extract_strided_slice %181 {offsets = [0, 64], sizes = [2, 32], strides = [1, 1]} : vector<2x96xf32> to vector<2x32xf32>
    %185 = arith.mulf %183, %149 : vector<2x32xf32>
    %186 = vector.extract_strided_slice %175 {offsets = [0, 96], sizes = [2, 32], strides = [1, 1]} : vector<2x128xf32> to vector<2x32xf32>
    %187 = math.tanh %186 : vector<2x32xf32>
    %188 = arith.mulf %182, %187 : vector<2x32xf32>
    %189 = arith.addf %185, %188 : vector<2x32xf32>
    %190 = math.tanh %189 : vector<2x32xf32>
    %191 = arith.mulf %184, %190 : vector<2x32xf32>
    %192 = tpu.concatenate %191, %171 in 1 : vector<2x32xf32>, vector<2x32xf32> -> vector<2x64xf32>
    %cst_22 = arith.constant dense<0.000000e+00> : vector<2x256xf32>
    %193 = tpu.matmul %192, %2, %cst_22 {dimension_numbers = #tpu.dot_dimension_numbers<[1], [0], [0], [1], [0, 0, 1, 1], [], []>} : vector<2x64xf32>, vector<64x256xf32>, vector<2x256xf32> -> vector<2x256xf32>
    %194 = vector.extract_strided_slice %193 {offsets = [0, 0], sizes = [2, 128], strides = [1, 1]} : vector<2x256xf32> to vector<2x128xf32>
    %195 = arith.addf %194, %12 : vector<2x128xf32>
    %196 = vector.extract_strided_slice %195 {offsets = [0, 0], sizes = [2, 96], strides = [1, 1]} : vector<2x128xf32> to vector<2x96xf32>
    %197 = arith.negf %196 : vector<2x96xf32>
    %198 = math.exp %197 : vector<2x96xf32>
    %cst_23 = arith.constant 1.000000e+00 : f32
    %199 = vector.broadcast %cst_23 : f32 to vector<2x96xf32>
    %200 = arith.addf %199, %198 : vector<2x96xf32>
    %201 = arith.divf %199, %200 : vector<2x96xf32>
    %202 = vector.extract_strided_slice %201 {offsets = [0, 0], sizes = [2, 32], strides = [1, 1]} : vector<2x96xf32> to vector<2x32xf32>
    %203 = vector.extract_strided_slice %201 {offsets = [0, 32], sizes = [2, 32], strides = [1, 1]} : vector<2x96xf32> to vector<2x32xf32>
    %204 = vector.extract_strided_slice %201 {offsets = [0, 64], sizes = [2, 32], strides = [1, 1]} : vector<2x96xf32> to vector<2x32xf32>
    %205 = arith.mulf %203, %169 : vector<2x32xf32>
    %206 = vector.extract_strided_slice %195 {offsets = [0, 96], sizes = [2, 32], strides = [1, 1]} : vector<2x128xf32> to vector<2x32xf32>
    %207 = math.tanh %206 : vector<2x32xf32>
    %208 = arith.mulf %202, %207 : vector<2x32xf32>
    %209 = arith.addf %205, %208 : vector<2x32xf32>
    %210 = math.tanh %209 : vector<2x32xf32>
    %211 = arith.mulf %204, %210 : vector<2x32xf32>
    %212 = vector.extract_strided_slice %193 {offsets = [0, 128], sizes = [2, 128], strides = [1, 1]} : vector<2x256xf32> to vector<2x128xf32>
    %213 = vector.extract_strided_slice %10 {offsets = [5, 0, 0], sizes = [1, 2, 128], strides = [1, 1, 1]} : vector<8x2x128xf32> to vector<1x2x128xf32>
    %214 = vector.shape_cast %213 : vector<1x2x128xf32> to vector<2x128xf32>
    %215 = arith.addf %212, %214 : vector<2x128xf32>
    %216 = vector.extract_strided_slice %215 {offsets = [0, 0], sizes = [2, 96], strides = [1, 1]} : vector<2x128xf32> to vector<2x96xf32>
    %217 = arith.negf %216 : vector<2x96xf32>
    %218 = math.exp %217 : vector<2x96xf32>
    %cst_24 = arith.constant 1.000000e+00 : f32
    %219 = vector.broadcast %cst_24 : f32 to vector<2x96xf32>
    %220 = arith.addf %219, %218 : vector<2x96xf32>
    %221 = arith.divf %219, %220 : vector<2x96xf32>
    %222 = vector.extract_strided_slice %221 {offsets = [0, 0], sizes = [2, 32], strides = [1, 1]} : vector<2x96xf32> to vector<2x32xf32>
    %223 = vector.extract_strided_slice %221 {offsets = [0, 32], sizes = [2, 32], strides = [1, 1]} : vector<2x96xf32> to vector<2x32xf32>
    %224 = vector.extract_strided_slice %221 {offsets = [0, 64], sizes = [2, 32], strides = [1, 1]} : vector<2x96xf32> to vector<2x32xf32>
    %225 = arith.mulf %223, %189 : vector<2x32xf32>
    %226 = vector.extract_strided_slice %215 {offsets = [0, 96], sizes = [2, 32], strides = [1, 1]} : vector<2x128xf32> to vector<2x32xf32>
    %227 = math.tanh %226 : vector<2x32xf32>
    %228 = arith.mulf %222, %227 : vector<2x32xf32>
    %229 = arith.addf %225, %228 : vector<2x32xf32>
    %230 = math.tanh %229 : vector<2x32xf32>
    %231 = arith.mulf %224, %230 : vector<2x32xf32>
    %232 = tpu.concatenate %231, %211 in 1 : vector<2x32xf32>, vector<2x32xf32> -> vector<2x64xf32>
    %cst_25 = arith.constant dense<0.000000e+00> : vector<2x256xf32>
    %233 = tpu.matmul %232, %2, %cst_25 {dimension_numbers = #tpu.dot_dimension_numbers<[1], [0], [0], [1], [0, 0, 1, 1], [], []>} : vector<2x64xf32>, vector<64x256xf32>, vector<2x256xf32> -> vector<2x256xf32>
    %234 = vector.extract_strided_slice %233 {offsets = [0, 0], sizes = [2, 128], strides = [1, 1]} : vector<2x256xf32> to vector<2x128xf32>
    %235 = arith.addf %234, %12 : vector<2x128xf32>
    %236 = vector.extract_strided_slice %235 {offsets = [0, 0], sizes = [2, 96], strides = [1, 1]} : vector<2x128xf32> to vector<2x96xf32>
    %237 = arith.negf %236 : vector<2x96xf32>
    %238 = math.exp %237 : vector<2x96xf32>
    %cst_26 = arith.constant 1.000000e+00 : f32
    %239 = vector.broadcast %cst_26 : f32 to vector<2x96xf32>
    %240 = arith.addf %239, %238 : vector<2x96xf32>
    %241 = arith.divf %239, %240 : vector<2x96xf32>
    %242 = vector.extract_strided_slice %241 {offsets = [0, 0], sizes = [2, 32], strides = [1, 1]} : vector<2x96xf32> to vector<2x32xf32>
    %243 = vector.extract_strided_slice %241 {offsets = [0, 32], sizes = [2, 32], strides = [1, 1]} : vector<2x96xf32> to vector<2x32xf32>
    %244 = vector.extract_strided_slice %241 {offsets = [0, 64], sizes = [2, 32], strides = [1, 1]} : vector<2x96xf32> to vector<2x32xf32>
    %245 = arith.mulf %243, %209 : vector<2x32xf32>
    %246 = vector.extract_strided_slice %235 {offsets = [0, 96], sizes = [2, 32], strides = [1, 1]} : vector<2x128xf32> to vector<2x32xf32>
    %247 = math.tanh %246 : vector<2x32xf32>
    %248 = arith.mulf %242, %247 : vector<2x32xf32>
    %249 = arith.addf %245, %248 : vector<2x32xf32>
    %250 = math.tanh %249 : vector<2x32xf32>
    %251 = arith.mulf %244, %250 : vector<2x32xf32>
    %252 = vector.extract_strided_slice %233 {offsets = [0, 128], sizes = [2, 128], strides = [1, 1]} : vector<2x256xf32> to vector<2x128xf32>
    %253 = vector.extract_strided_slice %10 {offsets = [6, 0, 0], sizes = [1, 2, 128], strides = [1, 1, 1]} : vector<8x2x128xf32> to vector<1x2x128xf32>
    %254 = vector.shape_cast %253 : vector<1x2x128xf32> to vector<2x128xf32>
    %255 = arith.addf %252, %254 : vector<2x128xf32>
    %256 = vector.extract_strided_slice %255 {offsets = [0, 0], sizes = [2, 96], strides = [1, 1]} : vector<2x128xf32> to vector<2x96xf32>
    %257 = arith.negf %256 : vector<2x96xf32>
    %258 = math.exp %257 : vector<2x96xf32>
    %cst_27 = arith.constant 1.000000e+00 : f32
    %259 = vector.broadcast %cst_27 : f32 to vector<2x96xf32>
    %260 = arith.addf %259, %258 : vector<2x96xf32>
    %261 = arith.divf %259, %260 : vector<2x96xf32>
    %262 = vector.extract_strided_slice %261 {offsets = [0, 0], sizes = [2, 32], strides = [1, 1]} : vector<2x96xf32> to vector<2x32xf32>
    %263 = vector.extract_strided_slice %261 {offsets = [0, 32], sizes = [2, 32], strides = [1, 1]} : vector<2x96xf32> to vector<2x32xf32>
    %264 = vector.extract_strided_slice %261 {offsets = [0, 64], sizes = [2, 32], strides = [1, 1]} : vector<2x96xf32> to vector<2x32xf32>
    %265 = arith.mulf %263, %229 : vector<2x32xf32>
    %266 = vector.extract_strided_slice %255 {offsets = [0, 96], sizes = [2, 32], strides = [1, 1]} : vector<2x128xf32> to vector<2x32xf32>
    %267 = math.tanh %266 : vector<2x32xf32>
    %268 = arith.mulf %262, %267 : vector<2x32xf32>
    %269 = arith.addf %265, %268 : vector<2x32xf32>
    %270 = math.tanh %269 : vector<2x32xf32>
    %271 = arith.mulf %264, %270 : vector<2x32xf32>
    %272 = tpu.concatenate %271, %251 in 1 : vector<2x32xf32>, vector<2x32xf32> -> vector<2x64xf32>
    %cst_28 = arith.constant dense<0.000000e+00> : vector<2x256xf32>
    %273 = tpu.matmul %272, %2, %cst_28 {dimension_numbers = #tpu.dot_dimension_numbers<[1], [0], [0], [1], [0, 0, 1, 1], [], []>} : vector<2x64xf32>, vector<64x256xf32>, vector<2x256xf32> -> vector<2x256xf32>
    %274 = vector.extract_strided_slice %273 {offsets = [0, 0], sizes = [2, 128], strides = [1, 1]} : vector<2x256xf32> to vector<2x128xf32>
    %275 = arith.addf %274, %12 : vector<2x128xf32>
    %276 = vector.extract_strided_slice %275 {offsets = [0, 0], sizes = [2, 96], strides = [1, 1]} : vector<2x128xf32> to vector<2x96xf32>
    %277 = arith.negf %276 : vector<2x96xf32>
    %278 = math.exp %277 : vector<2x96xf32>
    %cst_29 = arith.constant 1.000000e+00 : f32
    %279 = vector.broadcast %cst_29 : f32 to vector<2x96xf32>
    %280 = arith.addf %279, %278 : vector<2x96xf32>
    %281 = arith.divf %279, %280 : vector<2x96xf32>
    %282 = vector.extract_strided_slice %281 {offsets = [0, 0], sizes = [2, 32], strides = [1, 1]} : vector<2x96xf32> to vector<2x32xf32>
    %283 = vector.extract_strided_slice %281 {offsets = [0, 32], sizes = [2, 32], strides = [1, 1]} : vector<2x96xf32> to vector<2x32xf32>
    %284 = vector.extract_strided_slice %281 {offsets = [0, 64], sizes = [2, 32], strides = [1, 1]} : vector<2x96xf32> to vector<2x32xf32>
    %285 = arith.mulf %283, %249 : vector<2x32xf32>
    %286 = vector.extract_strided_slice %275 {offsets = [0, 96], sizes = [2, 32], strides = [1, 1]} : vector<2x128xf32> to vector<2x32xf32>
    %287 = math.tanh %286 : vector<2x32xf32>
    %288 = arith.mulf %282, %287 : vector<2x32xf32>
    %289 = arith.addf %285, %288 : vector<2x32xf32>
    %290 = math.tanh %289 : vector<2x32xf32>
    %291 = arith.mulf %284, %290 : vector<2x32xf32>
    %292 = vector.extract_strided_slice %273 {offsets = [0, 128], sizes = [2, 128], strides = [1, 1]} : vector<2x256xf32> to vector<2x128xf32>
    %293 = vector.extract_strided_slice %10 {offsets = [7, 0, 0], sizes = [1, 2, 128], strides = [1, 1, 1]} : vector<8x2x128xf32> to vector<1x2x128xf32>
    %294 = vector.shape_cast %293 : vector<1x2x128xf32> to vector<2x128xf32>
    %295 = arith.addf %292, %294 : vector<2x128xf32>
    %296 = vector.extract_strided_slice %295 {offsets = [0, 0], sizes = [2, 96], strides = [1, 1]} : vector<2x128xf32> to vector<2x96xf32>
    %297 = arith.negf %296 : vector<2x96xf32>
    %298 = math.exp %297 : vector<2x96xf32>
    %cst_30 = arith.constant 1.000000e+00 : f32
    %299 = vector.broadcast %cst_30 : f32 to vector<2x96xf32>
    %300 = arith.addf %299, %298 : vector<2x96xf32>
    %301 = arith.divf %299, %300 : vector<2x96xf32>
    %302 = vector.extract_strided_slice %301 {offsets = [0, 0], sizes = [2, 32], strides = [1, 1]} : vector<2x96xf32> to vector<2x32xf32>
    %303 = vector.extract_strided_slice %301 {offsets = [0, 32], sizes = [2, 32], strides = [1, 1]} : vector<2x96xf32> to vector<2x32xf32>
    %304 = vector.extract_strided_slice %301 {offsets = [0, 64], sizes = [2, 32], strides = [1, 1]} : vector<2x96xf32> to vector<2x32xf32>
    %305 = arith.mulf %303, %269 : vector<2x32xf32>
    %306 = vector.extract_strided_slice %295 {offsets = [0, 96], sizes = [2, 32], strides = [1, 1]} : vector<2x128xf32> to vector<2x32xf32>
    %307 = math.tanh %306 : vector<2x32xf32>
    %308 = arith.mulf %302, %307 : vector<2x32xf32>
    %309 = arith.addf %305, %308 : vector<2x32xf32>
    %310 = math.tanh %309 : vector<2x32xf32>
    %311 = arith.mulf %304, %310 : vector<2x32xf32>
    %312 = tpu.concatenate %311, %291 in 1 : vector<2x32xf32>, vector<2x32xf32> -> vector<2x64xf32>
    %cst_31 = arith.constant dense<0.000000e+00> : vector<2x256xf32>
    %313 = tpu.matmul %312, %2, %cst_31 {dimension_numbers = #tpu.dot_dimension_numbers<[1], [0], [0], [1], [0, 0, 1, 1], [], []>} : vector<2x64xf32>, vector<64x256xf32>, vector<2x256xf32> -> vector<2x256xf32>
    %314 = vector.extract_strided_slice %313 {offsets = [0, 0], sizes = [2, 128], strides = [1, 1]} : vector<2x256xf32> to vector<2x128xf32>
    %315 = arith.addf %314, %12 : vector<2x128xf32>
    %316 = vector.extract_strided_slice %315 {offsets = [0, 0], sizes = [2, 96], strides = [1, 1]} : vector<2x128xf32> to vector<2x96xf32>
    %317 = arith.negf %316 : vector<2x96xf32>
    %318 = math.exp %317 : vector<2x96xf32>
    %cst_32 = arith.constant 1.000000e+00 : f32
    %319 = vector.broadcast %cst_32 : f32 to vector<2x96xf32>
    %320 = arith.addf %319, %318 : vector<2x96xf32>
    %321 = arith.divf %319, %320 : vector<2x96xf32>
    %322 = vector.extract_strided_slice %321 {offsets = [0, 0], sizes = [2, 32], strides = [1, 1]} : vector<2x96xf32> to vector<2x32xf32>
    %323 = vector.extract_strided_slice %321 {offsets = [0, 32], sizes = [2, 32], strides = [1, 1]} : vector<2x96xf32> to vector<2x32xf32>
    %324 = vector.extract_strided_slice %321 {offsets = [0, 64], sizes = [2, 32], strides = [1, 1]} : vector<2x96xf32> to vector<2x32xf32>
    %325 = arith.mulf %323, %289 : vector<2x32xf32>
    %326 = vector.extract_strided_slice %315 {offsets = [0, 96], sizes = [2, 32], strides = [1, 1]} : vector<2x128xf32> to vector<2x32xf32>
    %327 = math.tanh %326 : vector<2x32xf32>
    %328 = arith.mulf %322, %327 : vector<2x32xf32>
    %329 = arith.addf %325, %328 : vector<2x32xf32>
    %330 = math.tanh %329 : vector<2x32xf32>
    %331 = arith.mulf %324, %330 : vector<2x32xf32>
    %cst_33 = arith.constant dense<0.000000e+00> : vector<2x128xf32>
    %332 = tpu.matmul %331, %4, %cst_33 {dimension_numbers = #tpu.dot_dimension_numbers<[1], [0], [0], [1], [0, 0, 1, 1], [], []>} : vector<2x32xf32>, vector<32x128xf32>, vector<2x128xf32> -> vector<2x128xf32>
    %333 = vector.broadcast %5 : vector<1x128xf32> to vector<2x128xf32>
    %334 = arith.addf %332, %333 : vector<2x128xf32>
    %335 = vector.extract_strided_slice %334 {offsets = [0, 0], sizes = [2, 4], strides = [1, 1]} : vector<2x128xf32> to vector<2x4xf32>
    %c0_34 = arith.constant 0 : index
    %c0_35 = arith.constant 0 : index
    %336 = vector.load %arg2[%c0_34, %c0_35] : memref<2x4xf32, #tpu.memory_space<vmem>>, vector<2x4xf32>
    tpu.vector_store %arg2[%c0_34, %c0_35], %335 {strides = array<i32>} : memref<2x4xf32, #tpu.memory_space<vmem>>, vector<2x4xf32>,
    return
  }
}

</mosaic_0001>

<llo_original>
// kernel: tpu_custom_call.1
$region0: #{tpu_custom_call.1}
  #allocation0 [shape = 'u32[]', space=smem, size = 0x4, offset = 0x4, fixed_abs, tag = 'smem constant byte address 0x4 - core index']
  #allocation1 [shape = 'u32[144,128]{1,0:T(1,128)}', space=vmem, size = 0x12000, scoped, tag = 'internal scratch']
  %s0 = inlined_call_operand.hbm [shape: f32[16,19], index: 0, kind: input, shape index: {}]
  %s1 = inlined_call_operand.hbm [shape: f32[144,256], index: 1, kind: input, shape index: {}]
  %s2 = inlined_call_operand.hbm [shape: f32[2,4], index: 2, kind: output, shape index: {}]
  %s3 = sld [smem:[#allocation0]]
  $region26: #{tpu_custom_call.1} parent=0
    _
  %s5 = ssub.s32 1, %s3
  %s6 = scalar_select 0, %s5, %s3
  $region1: #{tpu_custom_call.1} parent=0
    #allocation2 [shape = 'u8[8192]{0}', space=vmem, size = 0x2000, scoped, tag = 'input window, operand 0, single buffered']
    #allocation3 [shape = 's32[1]{0}', space=sflag, size = 0x4, scoped, tag = 'scoped memory for tpu_custom_call.1']
    #allocation4 [shape = 's32[1]{0}', space=sflag, size = 0x4, scoped, tag = 'scoped memory for tpu_custom_call.1']
    #allocation5 [shape = 'u8[147456]{0}', space=vmem, size = 0x24000, scoped, tag = 'input window, operand 1, single buffered']
    #allocation6 [shape = 's32[1]{0}', space=sflag, size = 0x4, scoped, tag = 'scoped memory for tpu_custom_call.1']
    #allocation7 [shape = 'u8[1024]{0}', space=vmem, size = 0x400, scoped, tag = 'output window, operand 0, single buffered']
    %7 = vsyncpa [#allocation3], 0
    %8 = vsyncpa [#allocation6], 0
    %9 = vsyncpa [#allocation4], 0
    // Predicated region
    $region2: #{tpu_custom_call.1} parent=1 // pred_check
      _
    $region3: #{tpu_custom_call.1} parent=1 // pred_check_branch
      %11 = sbr.rel (0) target = $region5
    $region4: #{tpu_custom_call.1} parent=1 // pred_region
      %s13 = ssub.s32 256, 256
      %14 = vsyncadd [#allocation3], %s13
      %s15 = sshll.u32 [#allocation2], 4
      %s16 = int_to_ptr.vmem [resolvable:$true] %s15
      %21 = dma.hbm_to_vmem [thread:$0]  %s0, 256, %s16, [#allocation3], 128, 128, 8
    $region5: #{tpu_custom_call.1} parent=1 // pred_fallthru
      _
    // Predicated region
    $region6: #{tpu_custom_call.1} parent=1 // pred_check
      _
    $region7: #{tpu_custom_call.1} parent=1 // pred_check_branch
      %23 = sbr.rel (0) target = $region9
    $region8: #{tpu_custom_call.1} parent=1 // pred_region
      %s25 = ssub.s32 4608, 4608
      %26 = vsyncadd [#allocation6], %s25
      %s27 = sshll.u32 [#allocation5], 4
      %s28 = int_to_ptr.vmem [resolvable:$true] %s27
      %33 = dma.hbm_to_vmem [thread:$0]  %s1, 4608, %s28, [#allocation6], 256, 256, 16
    $region9: #{tpu_custom_call.1} parent=1 // pred_fallthru
      _
    // Predicated region
    $region10: #{tpu_custom_call.1} parent=1 // pred_check
      _
    $region11: #{tpu_custom_call.1} parent=1 // pred_check_branch
      %35 = sbr.rel (0) target = $region13
    $region12: #{tpu_custom_call.1} parent=1 // pred_region
      %36 = dma.done [#allocation3], 256
    $region13: #{tpu_custom_call.1} parent=1 // pred_fallthru
      _
    // Predicated region
    $region14: #{tpu_custom_call.1} parent=1 // pred_check
      _
    $region15: #{tpu_custom_call.1} parent=1 // pred_check_branch
      %38 = sbr.rel (0) target = $region17
    $region16: #{tpu_custom_call.1} parent=1 // pred_region
      %39 = dma.done [#allocation6], 4608
    $region17: #{tpu_custom_call.1} parent=1 // pred_fallthru
      _
    %v40 = vld [vmem:[#allocation5] sm:$0xff]
    %v41 = vld [vmem:[#allocation5 + $0x10] sm:$0xff]
    %v42 = vld [vmem:[#allocation5 + $0x20] sm:$0x7]
    %v43 = vld [vmem:[#allocation5 + $0x30] ss:$0 sm:$0xff]
    %v44 = vld [vmem:[#allocation5 + $0x40] sm:$0xff]
    %v45 = vld [vmem:[#allocation5 + $0x48] sm:$0xff]
    %v46 = vld [vmem:[#allocation5 + $0x50] sm:$0xff]
    %v47 = vld [vmem:[#allocation5 + $0x58] sm:$0xff]
    %v48 = vld [vmem:[#allocation5 + $0x60] sm:$0xff]
    %v49 = vld [vmem:[#allocation5 + $0x68] sm:$0xff]
    %v50 = vld [vmem:[#allocation5 + $0x70] sm:$0xff]
    %v51 = vld [vmem:[#allocation5 + $0x78] sm:$0xff]
    %v52 = vld [vmem:[#allocation5 + $0x80] sm:$0xff]
    %v53 = vld [vmem:[#allocation5 + $0x88] sm:$0xff]
    %v54 = vld [vmem:[#allocation5 + $0x90] sm:$0xff]
    %v55 = vld [vmem:[#allocation5 + $0x98] sm:$0xff]
    %v56 = vld [vmem:[#allocation5 + $0xa0] sm:$0xff]
    %v57 = vld [vmem:[#allocation5 + $0xa8] sm:$0xff]
    %v58 = vld [vmem:[#allocation5 + $0xb0] sm:$0xff]
    %v59 = vld [vmem:[#allocation5 + $0xb8] sm:$0xff]
    %v60 = vld [vmem:[#allocation5 + $0xc0] ss:$0 sm:$0xff]
    %v61 = vld [vmem:[#allocation5 + $0xd0] sm:$0xff]
    %v62 = vld [vmem:[#allocation5 + $0xe0] sm:$0xff]
    %v63 = vld [vmem:[#allocation5 + $0xf0] sm:$0xff]
    %v64 = vld [vmem:[#allocation5 + $0x100] sm:$0xff]
    %v65 = vld [vmem:[#allocation5 + $0x110] ss:$0 sm:$0xff]
    %v66 = vld [vmem:[#allocation2] sm:$0xff]
    %v67 = vld [vmem:[#allocation2 + $0x8] sm:$0xff]
    %vm68 = vcmask 154624
    %v70 = vsel %vm68, %v66, 0
    %v73 = vsel %vm68, %v67, 0
    %vm75 = vcmask 1042432
    %v77 = vsel %vm75, %v42, 0
    %79 = vmatprep.subr.mxu0 0.0
    %80 = vmatpush1.msra.mxu0 %v40
    %81 = vmatprep.subr.mxu0 0.0
    %82 = vmatpush1.msra.mxu0 %v41
    %83 = vmatprep.subr.mxu0 0.0
    %84 = vmatpush1.msra.mxu0 %v77
    %85 = vmatprep.subr.mxu0 0.0
    %86 = vmatpush1.msra.mxu0 0.0
    %87 = vmatprep.subr.mxu0 0.0
    %88 = vmatpush1.msra.mxu0 0.0
    %89 = vmatprep.subr.mxu0 0.0
    %90 = vmatpush1.msra.mxu0 0.0
    %91 = vmatprep.subr.mxu0 0.0
    %92 = vmatpush1.msra.mxu0 0.0
    %93 = vmatprep.subr.mxu0 0.0
    %94 = vmatpush1.msra.mxu0 0.0
    %95 = vmatprep.subr.mxu0 0.0
    %96 = vmatpush1.msra.mxu0 0.0
    %97 = vmatprep.subr.mxu0 0.0
    %98 = vmatpush1.msra.mxu0 0.0
    %99 = vmatprep.subr.mxu0 0.0
    %100 = vmatpush1.msra.mxu0 0.0
    %101 = vmatprep.subr.mxu0 0.0
    %102 = vmatpush1.msra.mxu0 0.0
    %103 = vmatprep.subr.mxu0 0.0
    %104 = vmatpush1.msra.mxu0 0.0
    %105 = vmatprep.subr.mxu0 0.0
    %106 = vmatpush1.msra.mxu0 0.0
    %107 = vmatprep.subr.mxu0 0.0
    %108 = vmatpush1.msra.mxu0 0.0
    %109 = vmatprep.subr.mxu0 0.0
    %110 = vmatpush1.msra.mxu0 0.0
    %111 = vmatprep.subr.mxu0 0.0
    %112 = vmatpush1.msra.mxu0 0.0
    %113 = vmatprep.subr.mxu0 0.0
    %114 = vmatpush1.msra.mxu0 0.0
    %115 = vmatprep.subr.mxu0 0.0
    %116 = vmatpush1.msra.mxu0 0.0
    %117 = vmatprep.subr.mxu0 0.0
    %118 = vmatpush1.msra.mxu0 0.0
    %119 = vmatprep.subr.mxu0 0.0
    %120 = vmatpush1.msra.mxu0 0.0
    %121 = vmatprep.subr.mxu0 0.0
    %122 = vmatpush1.msra.mxu0 0.0
    %123 = vmatprep.subr.mxu0 0.0
    %124 = vmatpush1.msra.mxu0 0.0
    %125 = vmatprep.subr.mxu0 0.0
    %126 = vmatpush1.msra.mxu0 0.0
    %127 = vmatprep.subr.mxu0 0.0
    %128 = vmatpush1.msra.mxu0 0.0
    %129 = vmatprep.subr.mxu0 0.0
    %130 = vmatpush1.msra.mxu0 0.0
    %131 = vmatprep.subr.mxu0 0.0
    %132 = vmatpush1.msra.mxu0 0.0
    %133 = vmatprep.subr.mxu0 0.0
    %134 = vmatpush1.msra.mxu0 0.0
    %135 = vmatprep.subr.mxu0 0.0
    %136 = vmatpush1.msra.mxu0 0.0
    %137 = vmatprep.subr.mxu0 0.0
    %138 = vmatpush1.msra.mxu0 0.0
    %139 = vmatprep.subr.mxu0 0.0
    %140 = vmatpush1.msra.mxu0 0.0
    %141 = vmatprep.subr.mxu0 0.0
    %142 = vmatpush1.msra.mxu0 0.0
    %143 = vmatprep.mubr.f32.mxu0 0.0
    %144 = vmatmul.mubr.f32.gmra.mrb[0].mxu0 %v70
    %v145 = vpop.f32.mrb[0].mxu0
    %v146 = vadd.f32 %v43, %v145
    %v147 = vpop.f32.mrb[0].mxu0
    %148 = vmatprep.mubr.f32.mxu0 0.0
    %149 = vmatmul.mubr.f32.gmra.mrb[0].mxu0 %v73
    %v150 = vpop.f32.mrb[0].mxu0
    %v151 = vadd.f32 %v43, %v150
    %v152 = vpop.f32.mrb[0].mxu0
    %153 = vdwg.mxu0
    %v156 = vcombine.high %v146, %v146
    %v158 = vunpack.c.l.s4 1983009808
    %v159 = vunpack.c.0.s8 %v158
    %v160 = vlaneseq
    %v161 = vshrl.u32 %v160, 7
    %v162 = vsub.s32 %v159, %v161
    %v163 = vrot.slane %v146, %v162
    %v165 = vunpack.c.l.s4 1983009808
    %v166 = vunpack.c.0.s8 %v165
    %v167 = vlaneseq
    %v168 = vshrl.u32 %v167, 7
    %v169 = vsub.s32 %v166, %v168
    %v170 = vrot.slane %v156, %v169
    %v171 = vcombine.high %v163, %v163
    %v172 = vcombine.high %v170, %v170
    %v173 = vcombine.high %v151, %v151
    %v175 = vunpack.c.l.s4 1983009808
    %v176 = vunpack.c.0.s8 %v175
    %v177 = vlaneseq
    %v178 = vshrl.u32 %v177, 7
    %v179 = vsub.s32 %v176, %v178
    %v180 = vrot.slane %v151, %v179
    %v182 = vunpack.c.l.s4 1983009808
    %v183 = vunpack.c.0.s8 %v182
    %v184 = vlaneseq
    %v185 = vshrl.u32 %v184, 7
    %v186 = vsub.s32 %v183, %v185
    %v187 = vrot.slane %v173, %v186
    %v188 = vcombine.high %v180, %v180
    %v189 = vcombine.high %v187, %v187
    %v198 = vxor.u32 %v163, 2147483648
    %v199 = vmul.f32 %v198, 1.442695
    %v200 = vpow.pop %v199
    %v201 = vadd.f32 %v200, 1.0
    %v202 = vrcp.pop %v201
    %v203 = vmul.f32 1.0, %v202
    %v204 = vmul.f32 %v203, 0.0
    %v205 = vtanh.pop %v163
    %207 = vrot.lane.b32.xlu0 %v205, 32
    %v208 = vpop.permute.xlu0 %207
    %v210 = vmul.f32 %v203, %v208
    %212 = vrot.lane.b32.xlu0 %v210, 32
    %v213 = vpop.permute.xlu0 %212
    %v215 = vadd.f32 %v204, %v213
    %v216 = vtanh.pop %v215
    %218 = vrot.lane.b32.xlu0 %v216, 32
    %v219 = vpop.permute.xlu0 %218
    %v221 = vmul.f32 %v203, %v219
    %v224 = vunpack.c.l.s4 1983009808
    %v225 = vunpack.c.0.s8 %v224
    %v226 = vlaneseq
    %v227 = vshrl.u32 %v226, 7
    %v228 = vsub.s32 %v225, %v227
    %v229 = vrot.slane %v221, %v228
    %230 = vrot.lane.b32.xlu0 %v229, 64
    %v231 = vpop.permute.xlu0 %230
    %vm233 = vcmask 261120
    %v234 = vsel %vm233, %v231, 0.0
    %vm235 = vcmask 523264
    %v237 = vsel %vm235, %v234, 0
    %239 = vmatprep.subr.mxu0 %v45
    %240 = vmatpush1.msra.mxu0 %v44
    %241 = vmatprep.subr.mxu0 %v47
    %242 = vmatpush1.msra.mxu0 %v46
    %243 = vmatprep.subr.mxu0 %v49
    %244 = vmatpush1.msra.mxu0 %v48
    %245 = vmatprep.subr.mxu0 %v51
    %246 = vmatpush1.msra.mxu0 %v50
    %247 = vmatprep.subr.mxu0 %v53
    %248 = vmatpush1.msra.mxu0 %v52
    %249 = vmatprep.subr.mxu0 %v55
    %250 = vmatpush1.msra.mxu0 %v54
    %251 = vmatprep.subr.mxu0 %v57
    %252 = vmatpush1.msra.mxu0 %v56
    %253 = vmatprep.subr.mxu0 %v59
    %254 = vmatpush1.msra.mxu0 %v58
    %255 = vmatprep.subr.mxu0 0.0
    %256 = vmatpush1.msra.mxu0 0.0
    %257 = vmatprep.subr.mxu0 0.0
    %258 = vmatpush1.msra.mxu0 0.0
    %259 = vmatprep.subr.mxu0 0.0
    %260 = vmatpush1.msra.mxu0 0.0
    %261 = vmatprep.subr.mxu0 0.0
    %262 = vmatpush1.msra.mxu0 0.0
    %263 = vmatprep.subr.mxu0 0.0
    %264 = vmatpush1.msra.mxu0 0.0
    %265 = vmatprep.subr.mxu0 0.0
    %266 = vmatpush1.msra.mxu0 0.0
    %267 = vmatprep.subr.mxu0 0.0
    %268 = vmatpush1.msra.mxu0 0.0
    %269 = vmatprep.subr.mxu0 0.0
    %270 = vmatpush1.msra.mxu0 0.0
    %271 = vmatprep.subr.mxu0 0.0
    %272 = vmatpush1.msra.mxu0 0.0
    %273 = vmatprep.subr.mxu0 0.0
    %274 = vmatpush1.msra.mxu0 0.0
    %275 = vmatprep.subr.mxu0 0.0
    %276 = vmatpush1.msra.mxu0 0.0
    %277 = vmatprep.subr.mxu0 0.0
    %278 = vmatpush1.msra.mxu0 0.0
    %279 = vmatprep.subr.mxu0 0.0
    %280 = vmatpush1.msra.mxu0 0.0
    %281 = vmatprep.subr.mxu0 0.0
    %282 = vmatpush1.msra.mxu0 0.0
    %283 = vmatprep.subr.mxu0 0.0
    %284 = vmatpush1.msra.mxu0 0.0
    %285 = vmatprep.subr.mxu0 0.0
    %286 = vmatpush1.msra.mxu0 0.0
    %287 = vmatprep.subr.mxu0 0.0
    %288 = vmatpush1.msra.mxu0 0.0
    %289 = vmatprep.subr.mxu0 0.0
    %290 = vmatpush1.msra.mxu0 0.0
    %291 = vmatprep.subr.mxu0 0.0
    %292 = vmatpush1.msra.mxu0 0.0
    %293 = vmatprep.subr.mxu0 0.0
    %294 = vmatpush1.msra.mxu0 0.0
    %295 = vmatprep.subr.mxu0 0.0
    %296 = vmatpush1.msra.mxu0 0.0
    %297 = vmatprep.subr.mxu0 0.0
    %298 = vmatpush1.msra.mxu0 0.0
    %299 = vmatprep.subr.mxu0 0.0
    %300 = vmatpush1.msra.mxu0 0.0
    %301 = vmatprep.subr.mxu0 0.0
    %302 = vmatpush1.msra.mxu0 0.0
    %303 = vmatprep.mubr.f32.mxu0 0.0
    %304 = vmatmul.mubr.f32.gmra.mrb[0].mxu0 %v237
    %v305 = vpop.f32.mrb[0].mxu0
    %v306 = vadd.f32 0.0, %v305
    %v307 = vpop.f32.mrb[0].mxu0
    %v308 = vadd.f32 0.0, %v307
    %309 = vdwg.mxu0
    %v310 = vadd.f32 %v306, %v60
    %v311 = vxor.u32 %v310, 2147483648
    %v312 = vmul.f32 %v311, 1.442695
    %v313 = vpow.pop %v312
    %v314 = vadd.f32 %v313, 1.0
    %v315 = vrcp.pop %v314
    %v316 = vmul.f32 1.0, %v315
    %v317 = vmul.f32 %v316, 0.0
    %v318 = vtanh.pop %v310
    %320 = vrot.lane.b32.xlu0 %v318, 32
    %v321 = vpop.permute.xlu0 %320
    %v323 = vmul.f32 %v316, %v321
    %325 = vrot.lane.b32.xlu0 %v323, 32
    %v326 = vpop.permute.xlu0 %325
    %v328 = vadd.f32 %v317, %v326
    %v329 = vtanh.pop %v328
    %331 = vrot.lane.b32.xlu0 %v329, 32
    %v332 = vpop.permute.xlu0 %331
    %v334 = vmul.f32 %v316, %v332
    %v335 = vadd.f32 %v308, %v171
    %v336 = vxor.u32 %v335, 2147483648
    %v337 = vmul.f32 %v336, 1.442695
    %v338 = vpow.pop %v337
    %v339 = vadd.f32 %v338, 1.0
    %v340 = vrcp.pop %v339
    %v341 = vmul.f32 1.0, %v340
    %v342 = vmul.f32 %v341, %v215
    %v343 = vtanh.pop %v335
    %345 = vrot.lane.b32.xlu0 %v343, 32
    %v346 = vpop.permute.xlu0 %345
    %v348 = vmul.f32 %v341, %v346
    %350 = vrot.lane.b32.xlu0 %v348, 32
    %v351 = vpop.permute.xlu0 %350
    %v353 = vadd.f32 %v342, %v351
    %v354 = vtanh.pop %v353
    %356 = vrot.lane.b32.xlu0 %v354, 32
    %v357 = vpop.permute.xlu0 %356
    %v359 = vmul.f32 %v341, %v357
    %361 = vrot.lane.b32.xlu0 %v359, 64
    %v362 = vpop.permute.xlu0 %361
    %365 = vrot.lane.b32.xlu0 %v334, 96
    %v366 = vpop.permute.xlu0 %365
    %v368 = vsel %vm233, %v362, %v366
    %v370 = vsel %vm235, %v368, 0
    %372 = vmatprep.subr.mxu0 %v45
    %373 = vmatpush1.msra.mxu0 %v44
    %374 = vmatprep.subr.mxu0 %v47
    %375 = vmatpush1.msra.mxu0 %v46
    %376 = vmatprep.subr.mxu0 %v49
    %377 = vmatpush1.msra.mxu0 %v48
    %378 = vmatprep.subr.mxu0 %v51
    %379 = vmatpush1.msra.mxu0 %v50
    %380 = vmatprep.subr.mxu0 %v53
    %381 = vmatpush1.msra.mxu0 %v52
    %382 = vmatprep.subr.mxu0 %v55
    %383 = vmatpush1.msra.mxu0 %v54
    %384 = vmatprep.subr.mxu0 %v57
    %385 = vmatpush1.msra.mxu0 %v56
    %386 = vmatprep.subr.mxu0 %v59
    %387 = vmatpush1.msra.mxu0 %v58
    %388 = vmatprep.subr.mxu0 0.0
    %389 = vmatpush1.msra.mxu0 0.0
    %390 = vmatprep.subr.mxu0 0.0
    %391 = vmatpush1.msra.mxu0 0.0
    %392 = vmatprep.subr.mxu0 0.0
    %393 = vmatpush1.msra.mxu0 0.0
    %394 = vmatprep.subr.mxu0 0.0
    %395 = vmatpush1.msra.mxu0 0.0
    %396 = vmatprep.subr.mxu0 0.0
    %397 = vmatpush1.msra.mxu0 0.0
    %398 = vmatprep.subr.mxu0 0.0
    %399 = vmatpush1.msra.mxu0 0.0
    %400 = vmatprep.subr.mxu0 0.0
    %401 = vmatpush1.msra.mxu0 0.0
    %402 = vmatprep.subr.mxu0 0.0
    %403 = vmatpush1.msra.mxu0 0.0
    %404 = vmatprep.subr.mxu0 0.0
    %405 = vmatpush1.msra.mxu0 0.0
    %406 = vmatprep.subr.mxu0 0.0
    %407 = vmatpush1.msra.mxu0 0.0
    %408 = vmatprep.subr.mxu0 0.0
    %409 = vmatpush1.msra.mxu0 0.0
    %410 = vmatprep.subr.mxu0 0.0
    %411 = vmatpush1.msra.mxu0 0.0
    %412 = vmatprep.subr.mxu0 0.0
    %413 = vmatpush1.msra.mxu0 0.0
    %414 = vmatprep.subr.mxu0 0.0
    %415 = vmatpush1.msra.mxu0 0.0
    %416 = vmatprep.subr.mxu0 0.0
    %417 = vmatpush1.msra.mxu0 0.0
    %418 = vmatprep.subr.mxu0 0.0
    %419 = vmatpush1.msra.mxu0 0.0
    %420 = vmatprep.subr.mxu0 0.0
    %421 = vmatpush1.msra.mxu0 0.0
    %422 = vmatprep.subr.mxu0 0.0
    %423 = vmatpush1.msra.mxu0 0.0
    %424 = vmatprep.subr.mxu0 0.0
    %425 = vmatpush1.msra.mxu0 0.0
    %426 = vmatprep.subr.mxu0 0.0
    %427 = vmatpush1.msra.mxu0 0.0
    %428 = vmatprep.subr.mxu0 0.0
    %429 = vmatpush1.msra.mxu0 0.0
    %430 = vmatprep.subr.mxu0 0.0
    %431 = vmatpush1.msra.mxu0 0.0
    %432 = vmatprep.subr.mxu0 0.0
    %433 = vmatpush1.msra.mxu0 0.0
    %434 = vmatprep.subr.mxu0 0.0
    %435 = vmatpush1.msra.mxu0 0.0
    %436 = vmatprep.mubr.f32.mxu0 0.0
    %437 = vmatmul.mubr.f32.gmra.mrb[0].mxu0 %v370
    %v438 = vpop.f32.mrb[0].mxu0
    %v439 = vadd.f32 0.0, %v438
    %v440 = vpop.f32.mrb[0].mxu0
    %v441 = vadd.f32 0.0, %v440
    %442 = vdwg.mxu0
    %v443 = vadd.f32 %v439, %v60
    %v444 = vxor.u32 %v443, 2147483648
    %v445 = vmul.f32 %v444, 1.442695
    %v446 = vpow.pop %v445
    %v447 = vadd.f32 %v446, 1.0
    %v448 = vrcp.pop %v447
    %v449 = vmul.f32 1.0, %v448
    %v450 = vmul.f32 %v449, %v328
    %v451 = vtanh.pop %v443
    %453 = vrot.lane.b32.xlu0 %v451, 32
    %v454 = vpop.permute.xlu0 %453
    %v456 = vmul.f32 %v449, %v454
    %458 = vrot.lane.b32.xlu0 %v456, 32
    %v459 = vpop.permute.xlu0 %458
    %v461 = vadd.f32 %v450, %v459
    %v462 = vtanh.pop %v461
    %464 = vrot.lane.b32.xlu0 %v462, 32
    %v465 = vpop.permute.xlu0 %464
    %v467 = vmul.f32 %v449, %v465
    %v468 = vadd.f32 %v441, %v170
    %v469 = vxor.u32 %v468, 2147483648
    %v470 = vmul.f32 %v469, 1.442695
    %v471 = vpow.pop %v470
    %v472 = vadd.f32 %v471, 1.0
    %v473 = vrcp.pop %v472
    %v474 = vmul.f32 1.0, %v473
    %v475 = vmul.f32 %v474, %v353
    %v476 = vtanh.pop %v468
    %478 = vrot.lane.b32.xlu0 %v476, 32
    %v479 = vpop.permute.xlu0 %478
    %v481 = vmul.f32 %v474, %v479
    %483 = vrot.lane.b32.xlu0 %v481, 32
    %v484 = vpop.permute.xlu0 %483
    %v486 = vadd.f32 %v475, %v484
    %v487 = vtanh.pop %v486
    %489 = vrot.lane.b32.xlu0 %v487, 32
    %v490 = vpop.permute.xlu0 %489
    %v492 = vmul.f32 %v474, %v490
    %494 = vrot.lane.b32.xlu0 %v492, 64
    %v495 = vpop.permute.xlu0 %494
    %498 = vrot.lane.b32.xlu0 %v467, 96
    %v499 = vpop.permute.xlu0 %498
    %v501 = vsel %vm233, %v495, %v499
    %v503 = vsel %vm235, %v501, 0
    %505 = vmatprep.subr.mxu0 %v45
    %506 = vmatpush1.msra.mxu0 %v44
    %507 = vmatprep.subr.mxu0 %v47
    %508 = vmatpush1.msra.mxu0 %v46
    %509 = vmatprep.subr.mxu0 %v49
    %510 = vmatpush1.msra.mxu0 %v48
    %511 = vmatprep.subr.mxu0 %v51
    %512 = vmatpush1.msra.mxu0 %v50
    %513 = vmatprep.subr.mxu0 %v53
    %514 = vmatpush1.msra.mxu0 %v52
    %515 = vmatprep.subr.mxu0 %v55
    %516 = vmatpush1.msra.mxu0 %v54
    %517 = vmatprep.subr.mxu0 %v57
    %518 = vmatpush1.msra.mxu0 %v56
    %519 = vmatprep.subr.mxu0 %v59
    %520 = vmatpush1.msra.mxu0 %v58
    %521 = vmatprep.subr.mxu0 0.0
    %522 = vmatpush1.msra.mxu0 0.0
    %523 = vmatprep.subr.mxu0 0.0
    %524 = vmatpush1.msra.mxu0 0.0
    %525 = vmatprep.subr.mxu0 0.0
    %526 = vmatpush1.msra.mxu0 0.0
    %527 = vmatprep.subr.mxu0 0.0
    %528 = vmatpush1.msra.mxu0 0.0
    %529 = vmatprep.subr.mxu0 0.0
    %530 = vmatpush1.msra.mxu0 0.0
    %531 = vmatprep.subr.mxu0 0.0
    %532 = vmatpush1.msra.mxu0 0.0
    %533 = vmatprep.subr.mxu0 0.0
    %534 = vmatpush1.msra.mxu0 0.0
    %535 = vmatprep.subr.mxu0 0.0
    %536 = vmatpush1.msra.mxu0 0.0
    %537 = vmatprep.subr.mxu0 0.0
    %538 = vmatpush1.msra.mxu0 0.0
    %539 = vmatprep.subr.mxu0 0.0
    %540 = vmatpush1.msra.mxu0 0.0
    %541 = vmatprep.subr.mxu0 0.0
    %542 = vmatpush1.msra.mxu0 0.0
    %543 = vmatprep.subr.mxu0 0.0
    %544 = vmatpush1.msra.mxu0 0.0
    %545 = vmatprep.subr.mxu0 0.0
    %546 = vmatpush1.msra.mxu0 0.0
    %547 = vmatprep.subr.mxu0 0.0
    %548 = vmatpush1.msra.mxu0 0.0
    %549 = vmatprep.subr.mxu0 0.0
    %550 = vmatpush1.msra.mxu0 0.0
    %551 = vmatprep.subr.mxu0 0.0
    %552 = vmatpush1.msra.mxu0 0.0
    %553 = vmatprep.subr.mxu0 0.0
    %554 = vmatpush1.msra.mxu0 0.0
    %555 = vmatprep.subr.mxu0 0.0
    %556 = vmatpush1.msra.mxu0 0.0
    %557 = vmatprep.subr.mxu0 0.0
    %558 = vmatpush1.msra.mxu0 0.0
    %559 = vmatprep.subr.mxu0 0.0
    %560 = vmatpush1.msra.mxu0 0.0
    %561 = vmatprep.subr.mxu0 0.0
    %562 = vmatpush1.msra.mxu0 0.0
    %563 = vmatprep.subr.mxu0 0.0
    %564 = vmatpush1.msra.mxu0 0.0
    %565 = vmatprep.subr.mxu0 0.0
    %566 = vmatpush1.msra.mxu0 0.0
    %567 = vmatprep.subr.mxu0 0.0
    %568 = vmatpush1.msra.mxu0 0.0
    %569 = vmatprep.mubr.f32.mxu0 0.0
    %570 = vmatmul.mubr.f32.gmra.mrb[0].mxu0 %v503
    %v571 = vpop.f32.mrb[0].mxu0
    %v572 = vadd.f32 0.0, %v571
    %v573 = vpop.f32.mrb[0].mxu0
    %v574 = vadd.f32 0.0, %v573
    %575 = vdwg.mxu0
    %v576 = vadd.f32 %v572, %v60
    %v577 = vxor.u32 %v576, 2147483648
    %v578 = vmul.f32 %v577, 1.442695
    %v579 = vpow.pop %v578
    %v580 = vadd.f32 %v579, 1.0
    %v581 = vrcp.pop %v580
    %v582 = vmul.f32 1.0, %v581
    %v583 = vmul.f32 %v582, %v461
    %v584 = vtanh.pop %v576
    %586 = vrot.lane.b32.xlu0 %v584, 32
    %v587 = vpop.permute.xlu0 %586
    %v589 = vmul.f32 %v582, %v587
    %591 = vrot.lane.b32.xlu0 %v589, 32
    %v592 = vpop.permute.xlu0 %591
    %v594 = vadd.f32 %v583, %v592
    %v595 = vtanh.pop %v594
    %597 = vrot.lane.b32.xlu0 %v595, 32
    %v598 = vpop.permute.xlu0 %597
    %v600 = vmul.f32 %v582, %v598
    %v601 = vadd.f32 %v574, %v172
    %v602 = vxor.u32 %v601, 2147483648
    %v603 = vmul.f32 %v602, 1.442695
    %v604 = vpow.pop %v603
    %v605 = vadd.f32 %v604, 1.0
    %v606 = vrcp.pop %v605
    %v607 = vmul.f32 1.0, %v606
    %v608 = vmul.f32 %v607, %v486
    %v609 = vtanh.pop %v601
    %611 = vrot.lane.b32.xlu0 %v609, 32
    %v612 = vpop.permute.xlu0 %611
    %v614 = vmul.f32 %v607, %v612
    %616 = vrot.lane.b32.xlu0 %v614, 32
    %v617 = vpop.permute.xlu0 %616
    %v619 = vadd.f32 %v608, %v617
    %v620 = vtanh.pop %v619
    %622 = vrot.lane.b32.xlu0 %v620, 32
    %v623 = vpop.permute.xlu0 %622
    %v625 = vmul.f32 %v607, %v623
    %627 = vrot.lane.b32.xlu0 %v625, 64
    %v628 = vpop.permute.xlu0 %627
    %631 = vrot.lane.b32.xlu0 %v600, 96
    %v632 = vpop.permute.xlu0 %631
    %v634 = vsel %vm233, %v628, %v632
    %v636 = vsel %vm235, %v634, 0
    %638 = vmatprep.subr.mxu0 %v45
    %639 = vmatpush1.msra.mxu0 %v44
    %640 = vmatprep.subr.mxu0 %v47
    %641 = vmatpush1.msra.mxu0 %v46
    %642 = vmatprep.subr.mxu0 %v49
    %643 = vmatpush1.msra.mxu0 %v48
    %644 = vmatprep.subr.mxu0 %v51
    %645 = vmatpush1.msra.mxu0 %v50
    %646 = vmatprep.subr.mxu0 %v53
    %647 = vmatpush1.msra.mxu0 %v52
    %648 = vmatprep.subr.mxu0 %v55
    %649 = vmatpush1.msra.mxu0 %v54
    %650 = vmatprep.subr.mxu0 %v57
    %651 = vmatpush1.msra.mxu0 %v56
    %652 = vmatprep.subr.mxu0 %v59
    %653 = vmatpush1.msra.mxu0 %v58
    %654 = vmatprep.subr.mxu0 0.0
    %655 = vmatpush1.msra.mxu0 0.0
    %656 = vmatprep.subr.mxu0 0.0
    %657 = vmatpush1.msra.mxu0 0.0
    %658 = vmatprep.subr.mxu0 0.0
    %659 = vmatpush1.msra.mxu0 0.0
    %660 = vmatprep.subr.mxu0 0.0
    %661 = vmatpush1.msra.mxu0 0.0
    %662 = vmatprep.subr.mxu0 0.0
    %663 = vmatpush1.msra.mxu0 0.0
    %664 = vmatprep.subr.mxu0 0.0
    %665 = vmatpush1.msra.mxu0 0.0
    %666 = vmatprep.subr.mxu0 0.0
    %667 = vmatpush1.msra.mxu0 0.0
    %668 = vmatprep.subr.mxu0 0.0
    %669 = vmatpush1.msra.mxu0 0.0
    %670 = vmatprep.subr.mxu0 0.0
    %671 = vmatpush1.msra.mxu0 0.0
    %672 = vmatprep.subr.mxu0 0.0
    %673 = vmatpush1.msra.mxu0 0.0
    %674 = vmatprep.subr.mxu0 0.0
    %675 = vmatpush1.msra.mxu0 0.0
    %676 = vmatprep.subr.mxu0 0.0
    %677 = vmatpush1.msra.mxu0 0.0
    %678 = vmatprep.subr.mxu0 0.0
    %679 = vmatpush1.msra.mxu0 0.0
    %680 = vmatprep.subr.mxu0 0.0
    %681 = vmatpush1.msra.mxu0 0.0
    %682 = vmatprep.subr.mxu0 0.0
    %683 = vmatpush1.msra.mxu0 0.0
    %684 = vmatprep.subr.mxu0 0.0
    %685 = vmatpush1.msra.mxu0 0.0
    %686 = vmatprep.subr.mxu0 0.0
    %687 = vmatpush1.msra.mxu0 0.0
    %688 = vmatprep.subr.mxu0 0.0
    %689 = vmatpush1.msra.mxu0 0.0
    %690 = vmatprep.subr.mxu0 0.0
    %691 = vmatpush1.msra.mxu0 0.0
    %692 = vmatprep.subr.mxu0 0.0
    %693 = vmatpush1.msra.mxu0 0.0
    %694 = vmatprep.subr.mxu0 0.0
    %695 = vmatpush1.msra.mxu0 0.0
    %696 = vmatprep.subr.mxu0 0.0
    %697 = vmatpush1.msra.mxu0 0.0
    %698 = vmatprep.subr.mxu0 0.0
    %699 = vmatpush1.msra.mxu0 0.0
    %700 = vmatprep.subr.mxu0 0.0
    %701 = vmatpush1.msra.mxu0 0.0
    %702 = vmatprep.mubr.f32.mxu0 0.0
    %703 = vmatmul.mubr.f32.gmra.mrb[0].mxu0 %v636
    %v704 = vpop.f32.mrb[0].mxu0
    %v705 = vadd.f32 0.0, %v704
    %v706 = vpop.f32.mrb[0].mxu0
    %v707 = vadd.f32 0.0, %v706
    %708 = vdwg.mxu0
    %v709 = vadd.f32 %v705, %v60
    %v710 = vxor.u32 %v709, 2147483648
    %v711 = vmul.f32 %v710, 1.442695
    %v712 = vpow.pop %v711
    %v713 = vadd.f32 %v712, 1.0
    %v714 = vrcp.pop %v713
    %v715 = vmul.f32 1.0, %v714
    %v716 = vmul.f32 %v715, %v594
    %v717 = vtanh.pop %v709
    %719 = vrot.lane.b32.xlu0 %v717, 32
    %v720 = vpop.permute.xlu0 %719
    %v722 = vmul.f32 %v715, %v720
    %724 = vrot.lane.b32.xlu0 %v722, 32
    %v725 = vpop.permute.xlu0 %724
    %v727 = vadd.f32 %v716, %v725
    %v728 = vtanh.pop %v727
    %730 = vrot.lane.b32.xlu0 %v728, 32
    %v731 = vpop.permute.xlu0 %730
    %v733 = vmul.f32 %v715, %v731
    %v734 = vadd.f32 %v707, %v180
    %v735 = vxor.u32 %v734, 2147483648
    %v736 = vmul.f32 %v735, 1.442695
    %v737 = vpow.pop %v736
    %v738 = vadd.f32 %v737, 1.0
    %v739 = vrcp.pop %v738
    %v740 = vmul.f32 1.0, %v739
    %v741 = vmul.f32 %v740, %v619
    %v742 = vtanh.pop %v734
    %744 = vrot.lane.b32.xlu0 %v742, 32
    %v745 = vpop.permute.xlu0 %744
    %v747 = vmul.f32 %v740, %v745
    %749 = vrot.lane.b32.xlu0 %v747, 32
    %v750 = vpop.permute.xlu0 %749
    %v752 = vadd.f32 %v741, %v750
    %v753 = vtanh.pop %v752
    %755 = vrot.lane.b32.xlu0 %v753, 32
    %v756 = vpop.permute.xlu0 %755
    %v758 = vmul.f32 %v740, %v756
    %760 = vrot.lane.b32.xlu0 %v758, 64
    %v761 = vpop.permute.xlu0 %760
    %764 = vrot.lane.b32.xlu0 %v733, 96
    %v765 = vpop.permute.xlu0 %764
    %v767 = vsel %vm233, %v761, %v765
    %v769 = vsel %vm235, %v767, 0
    %771 = vmatprep.subr.mxu0 %v45
    %772 = vmatpush1.msra.mxu0 %v44
    %773 = vmatprep.subr.mxu0 %v47
    %774 = vmatpush1.msra.mxu0 %v46
    %775 = vmatprep.subr.mxu0 %v49
    %776 = vmatpush1.msra.mxu0 %v48
    %777 = vmatprep.subr.mxu0 %v51
    %778 = vmatpush1.msra.mxu0 %v50
    %779 = vmatprep.subr.mxu0 %v53
    %780 = vmatpush1.msra.mxu0 %v52
    %781 = vmatprep.subr.mxu0 %v55
    %782 = vmatpush1.msra.mxu0 %v54
    %783 = vmatprep.subr.mxu0 %v57
    %784 = vmatpush1.msra.mxu0 %v56
    %785 = vmatprep.subr.mxu0 %v59
    %786 = vmatpush1.msra.mxu0 %v58
    %787 = vmatprep.subr.mxu0 0.0
    %788 = vmatpush1.msra.mxu0 0.0
    %789 = vmatprep.subr.mxu0 0.0
    %790 = vmatpush1.msra.mxu0 0.0
    %791 = vmatprep.subr.mxu0 0.0
    %792 = vmatpush1.msra.mxu0 0.0
    %793 = vmatprep.subr.mxu0 0.0
    %794 = vmatpush1.msra.mxu0 0.0
    %795 = vmatprep.subr.mxu0 0.0
    %796 = vmatpush1.msra.mxu0 0.0
    %797 = vmatprep.subr.mxu0 0.0
    %798 = vmatpush1.msra.mxu0 0.0
    %799 = vmatprep.subr.mxu0 0.0
    %800 = vmatpush1.msra.mxu0 0.0
    %801 = vmatprep.subr.mxu0 0.0
    %802 = vmatpush1.msra.mxu0 0.0
    %803 = vmatprep.subr.mxu0 0.0
    %804 = vmatpush1.msra.mxu0 0.0
    %805 = vmatprep.subr.mxu0 0.0
    %806 = vmatpush1.msra.mxu0 0.0
    %807 = vmatprep.subr.mxu0 0.0
    %808 = vmatpush1.msra.mxu0 0.0
    %809 = vmatprep.subr.mxu0 0.0
    %810 = vmatpush1.msra.mxu0 0.0
    %811 = vmatprep.subr.mxu0 0.0
    %812 = vmatpush1.msra.mxu0 0.0
    %813 = vmatprep.subr.mxu0 0.0
    %814 = vmatpush1.msra.mxu0 0.0
    %815 = vmatprep.subr.mxu0 0.0
    %816 = vmatpush1.msra.mxu0 0.0
    %817 = vmatprep.subr.mxu0 0.0
    %818 = vmatpush1.msra.mxu0 0.0
    %819 = vmatprep.subr.mxu0 0.0
    %820 = vmatpush1.msra.mxu0 0.0
    %821 = vmatprep.subr.mxu0 0.0
    %822 = vmatpush1.msra.mxu0 0.0
    %823 = vmatprep.subr.mxu0 0.0
    %824 = vmatpush1.msra.mxu0 0.0
    %825 = vmatprep.subr.mxu0 0.0
    %826 = vmatpush1.msra.mxu0 0.0
    %827 = vmatprep.subr.mxu0 0.0
    %828 = vmatpush1.msra.mxu0 0.0
    %829 = vmatprep.subr.mxu0 0.0
    %830 = vmatpush1.msra.mxu0 0.0
    %831 = vmatprep.subr.mxu0 0.0
    %832 = vmatpush1.msra.mxu0 0.0
    %833 = vmatprep.subr.mxu0 0.0
    %834 = vmatpush1.msra.mxu0 0.0
    %835 = vmatprep.mubr.f32.mxu0 0.0
    %836 = vmatmul.mubr.f32.gmra.mrb[0].mxu0 %v769
    %v837 = vpop.f32.mrb[0].mxu0
    %v838 = vadd.f32 0.0, %v837
    %v839 = vpop.f32.mrb[0].mxu0
    %v840 = vadd.f32 0.0, %v839
    %841 = vdwg.mxu0
    %v842 = vadd.f32 %v838, %v60
    %v843 = vxor.u32 %v842, 2147483648
    %v844 = vmul.f32 %v843, 1.442695
    %v845 = vpow.pop %v844
    %v846 = vadd.f32 %v845, 1.0
    %v847 = vrcp.pop %v846
    %v848 = vmul.f32 1.0, %v847
    %v849 = vmul.f32 %v848, %v727
    %v850 = vtanh.pop %v842
    %852 = vrot.lane.b32.xlu0 %v850, 32
    %v853 = vpop.permute.xlu0 %852
    %v855 = vmul.f32 %v848, %v853
    %857 = vrot.lane.b32.xlu0 %v855, 32
    %v858 = vpop.permute.xlu0 %857
    %v860 = vadd.f32 %v849, %v858
    %v861 = vtanh.pop %v860
    %863 = vrot.lane.b32.xlu0 %v861, 32
    %v864 = vpop.permute.xlu0 %863
    %v866 = vmul.f32 %v848, %v864
    %v867 = vadd.f32 %v840, %v188
    %v868 = vxor.u32 %v867, 2147483648
    %v869 = vmul.f32 %v868, 1.442695
    %v870 = vpow.pop %v869
    %v871 = vadd.f32 %v870, 1.0
    %v872 = vrcp.pop %v871
    %v873 = vmul.f32 1.0, %v872
    %v874 = vmul.f32 %v873, %v752
    %v875 = vtanh.pop %v867
    %877 = vrot.lane.b32.xlu0 %v875, 32
    %v878 = vpop.permute.xlu0 %877
    %v880 = vmul.f32 %v873, %v878
    %882 = vrot.lane.b32.xlu0 %v880, 32
    %v883 = vpop.permute.xlu0 %882
    %v885 = vadd.f32 %v874, %v883
    %v886 = vtanh.pop %v885
    %888 = vrot.lane.b32.xlu0 %v886, 32
    %v889 = vpop.permute.xlu0 %888
    %v891 = vmul.f32 %v873, %v889
    %893 = vrot.lane.b32.xlu0 %v891, 64
    %v894 = vpop.permute.xlu0 %893
    %897 = vrot.lane.b32.xlu0 %v866, 96
    %v898 = vpop.permute.xlu0 %897
    %v900 = vsel %vm233, %v894, %v898
    %v902 = vsel %vm235, %v900, 0
    %904 = vmatprep.subr.mxu0 %v45
    %905 = vmatpush1.msra.mxu0 %v44
    %906 = vmatprep.subr.mxu0 %v47
    %907 = vmatpush1.msra.mxu0 %v46
    %908 = vmatprep.subr.mxu0 %v49
    %909 = vmatpush1.msra.mxu0 %v48
    %910 = vmatprep.subr.mxu0 %v51
    %911 = vmatpush1.msra.mxu0 %v50
    %912 = vmatprep.subr.mxu0 %v53
    %913 = vmatpush1.msra.mxu0 %v52
    %914 = vmatprep.subr.mxu0 %v55
    %915 = vmatpush1.msra.mxu0 %v54
    %916 = vmatprep.subr.mxu0 %v57
    %917 = vmatpush1.msra.mxu0 %v56
    %918 = vmatprep.subr.mxu0 %v59
    %919 = vmatpush1.msra.mxu0 %v58
    %920 = vmatprep.subr.mxu0 0.0
    %921 = vmatpush1.msra.mxu0 0.0
    %922 = vmatprep.subr.mxu0 0.0
    %923 = vmatpush1.msra.mxu0 0.0
    %924 = vmatprep.subr.mxu0 0.0
    %925 = vmatpush1.msra.mxu0 0.0
    %926 = vmatprep.subr.mxu0 0.0
    %927 = vmatpush1.msra.mxu0 0.0
    %928 = vmatprep.subr.mxu0 0.0
    %929 = vmatpush1.msra.mxu0 0.0
    %930 = vmatprep.subr.mxu0 0.0
    %931 = vmatpush1.msra.mxu0 0.0
    %932 = vmatprep.subr.mxu0 0.0
    %933 = vmatpush1.msra.mxu0 0.0
    %934 = vmatprep.subr.mxu0 0.0
    %935 = vmatpush1.msra.mxu0 0.0
    %936 = vmatprep.subr.mxu0 0.0
    %937 = vmatpush1.msra.mxu0 0.0
    %938 = vmatprep.subr.mxu0 0.0
    %939 = vmatpush1.msra.mxu0 0.0
    %940 = vmatprep.subr.mxu0 0.0
    %941 = vmatpush1.msra.mxu0 0.0
    %942 = vmatprep.subr.mxu0 0.0
    %943 = vmatpush1.msra.mxu0 0.0
    %944 = vmatprep.subr.mxu0 0.0
    %945 = vmatpush1.msra.mxu0 0.0
    %946 = vmatprep.subr.mxu0 0.0
    %947 = vmatpush1.msra.mxu0 0.0
    %948 = vmatprep.subr.mxu0 0.0
    %949 = vmatpush1.msra.mxu0 0.0
    %950 = vmatprep.subr.mxu0 0.0
    %951 = vmatpush1.msra.mxu0 0.0
    %952 = vmatprep.subr.mxu0 0.0
    %953 = vmatpush1.msra.mxu0 0.0
    %954 = vmatprep.subr.mxu0 0.0
    %955 = vmatpush1.msra.mxu0 0.0
    %956 = vmatprep.subr.mxu0 0.0
    %957 = vmatpush1.msra.mxu0 0.0
    %958 = vmatprep.subr.mxu0 0.0
    %959 = vmatpush1.msra.mxu0 0.0
    %960 = vmatprep.subr.mxu0 0.0
    %961 = vmatpush1.msra.mxu0 0.0
    %962 = vmatprep.subr.mxu0 0.0
    %963 = vmatpush1.msra.mxu0 0.0
    %964 = vmatprep.subr.mxu0 0.0
    %965 = vmatpush1.msra.mxu0 0.0
    %966 = vmatprep.subr.mxu0 0.0
    %967 = vmatpush1.msra.mxu0 0.0
    %968 = vmatprep.mubr.f32.mxu0 0.0
    %969 = vmatmul.mubr.f32.gmra.mrb[0].mxu0 %v902
    %v970 = vpop.f32.mrb[0].mxu0
    %v971 = vadd.f32 0.0, %v970
    %v972 = vpop.f32.mrb[0].mxu0
    %v973 = vadd.f32 0.0, %v972
    %974 = vdwg.mxu0
    %v975 = vadd.f32 %v971, %v60
    %v976 = vxor.u32 %v975, 2147483648
    %v977 = vmul.f32 %v976, 1.442695
    %v978 = vpow.pop %v977
    %v979 = vadd.f32 %v978, 1.0
    %v980 = vrcp.pop %v979
    %v981 = vmul.f32 1.0, %v980
    %v982 = vmul.f32 %v981, %v860
    %v983 = vtanh.pop %v975
    %985 = vrot.lane.b32.xlu0 %v983, 32
    %v986 = vpop.permute.xlu0 %985
    %v988 = vmul.f32 %v981, %v986
    %990 = vrot.lane.b32.xlu0 %v988, 32
    %v991 = vpop.permute.xlu0 %990
    %v993 = vadd.f32 %v982, %v991
    %v994 = vtanh.pop %v993
    %996 = vrot.lane.b32.xlu0 %v994, 32
    %v997 = vpop.permute.xlu0 %996
    %v999 = vmul.f32 %v981, %v997
    %v1000 = vadd.f32 %v973, %v187
    %v1001 = vxor.u32 %v1000, 2147483648
    %v1002 = vmul.f32 %v1001, 1.442695
    %v1003 = vpow.pop %v1002
    %v1004 = vadd.f32 %v1003, 1.0
    %v1005 = vrcp.pop %v1004
    %v1006 = vmul.f32 1.0, %v1005
    %v1007 = vmul.f32 %v1006, %v885
    %v1008 = vtanh.pop %v1000
    %1010 = vrot.lane.b32.xlu0 %v1008, 32
    %v1011 = vpop.permute.xlu0 %1010
    %v1013 = vmul.f32 %v1006, %v1011
    %1015 = vrot.lane.b32.xlu0 %v1013, 32
    %v1016 = vpop.permute.xlu0 %1015
    %v1018 = vadd.f32 %v1007, %v1016
    %v1019 = vtanh.pop %v1018
    %1021 = vrot.lane.b32.xlu0 %v1019, 32
    %v1022 = vpop.permute.xlu0 %1021
    %v1024 = vmul.f32 %v1006, %v1022
    %1026 = vrot.lane.b32.xlu0 %v1024, 64
    %v1027 = vpop.permute.xlu0 %1026
    %1030 = vrot.lane.b32.xlu0 %v999, 96
    %v1031 = vpop.permute.xlu0 %1030
    %v1033 = vsel %vm233, %v1027, %v1031
    %v1035 = vsel %vm235, %v1033, 0
    %1037 = vmatprep.subr.mxu0 %v45
    %1038 = vmatpush1.msra.mxu0 %v44
    %1039 = vmatprep.subr.mxu0 %v47
    %1040 = vmatpush1.msra.mxu0 %v46
    %1041 = vmatprep.subr.mxu0 %v49
    %1042 = vmatpush1.msra.mxu0 %v48
    %1043 = vmatprep.subr.mxu0 %v51
    %1044 = vmatpush1.msra.mxu0 %v50
    %1045 = vmatprep.subr.mxu0 %v53
    %1046 = vmatpush1.msra.mxu0 %v52
    %1047 = vmatprep.subr.mxu0 %v55
    %1048 = vmatpush1.msra.mxu0 %v54
    %1049 = vmatprep.subr.mxu0 %v57
    %1050 = vmatpush1.msra.mxu0 %v56
    %1051 = vmatprep.subr.mxu0 %v59
    %1052 = vmatpush1.msra.mxu0 %v58
    %1053 = vmatprep.subr.mxu0 0.0
    %1054 = vmatpush1.msra.mxu0 0.0
    %1055 = vmatprep.subr.mxu0 0.0
    %1056 = vmatpush1.msra.mxu0 0.0
    %1057 = vmatprep.subr.mxu0 0.0
    %1058 = vmatpush1.msra.mxu0 0.0
    %1059 = vmatprep.subr.mxu0 0.0
    %1060 = vmatpush1.msra.mxu0 0.0
    %1061 = vmatprep.subr.mxu0 0.0
    %1062 = vmatpush1.msra.mxu0 0.0
    %1063 = vmatprep.subr.mxu0 0.0
    %1064 = vmatpush1.msra.mxu0 0.0
    %1065 = vmatprep.subr.mxu0 0.0
    %1066 = vmatpush1.msra.mxu0 0.0
    %1067 = vmatprep.subr.mxu0 0.0
    %1068 = vmatpush1.msra.mxu0 0.0
    %1069 = vmatprep.subr.mxu0 0.0
    %1070 = vmatpush1.msra.mxu0 0.0
    %1071 = vmatprep.subr.mxu0 0.0
    %1072 = vmatpush1.msra.mxu0 0.0
    %1073 = vmatprep.subr.mxu0 0.0
    %1074 = vmatpush1.msra.mxu0 0.0
    %1075 = vmatprep.subr.mxu0 0.0
    %1076 = vmatpush1.msra.mxu0 0.0
    %1077 = vmatprep.subr.mxu0 0.0
    %1078 = vmatpush1.msra.mxu0 0.0
    %1079 = vmatprep.subr.mxu0 0.0
    %1080 = vmatpush1.msra.mxu0 0.0
    %1081 = vmatprep.subr.mxu0 0.0
    %1082 = vmatpush1.msra.mxu0 0.0
    %1083 = vmatprep.subr.mxu0 0.0
    %1084 = vmatpush1.msra.mxu0 0.0
    %1085 = vmatprep.subr.mxu0 0.0
    %1086 = vmatpush1.msra.mxu0 0.0
    %1087 = vmatprep.subr.mxu0 0.0
    %1088 = vmatpush1.msra.mxu0 0.0
    %1089 = vmatprep.subr.mxu0 0.0
    %1090 = vmatpush1.msra.mxu0 0.0
    %1091 = vmatprep.subr.mxu0 0.0
    %1092 = vmatpush1.msra.mxu0 0.0
    %1093 = vmatprep.subr.mxu0 0.0
    %1094 = vmatpush1.msra.mxu0 0.0
    %1095 = vmatprep.subr.mxu0 0.0
    %1096 = vmatpush1.msra.mxu0 0.0
    %1097 = vmatprep.subr.mxu0 0.0
    %1098 = vmatpush1.msra.mxu0 0.0
    %1099 = vmatprep.subr.mxu0 0.0
    %1100 = vmatpush1.msra.mxu0 0.0
    %1101 = vmatprep.mubr.f32.mxu0 0.0
    %1102 = vmatmul.mubr.f32.gmra.mrb[0].mxu0 %v1035
    %v1103 = vpop.f32.mrb[0].mxu0
    %v1104 = vadd.f32 0.0, %v1103
    %v1105 = vpop.f32.mrb[0].mxu0
    %v1106 = vadd.f32 0.0, %v1105
    %1107 = vdwg.mxu0
    %v1108 = vadd.f32 %v1104, %v60
    %v1109 = vxor.u32 %v1108, 2147483648
    %v1110 = vmul.f32 %v1109, 1.442695
    %v1111 = vpow.pop %v1110
    %v1112 = vadd.f32 %v1111, 1.0
    %v1113 = vrcp.pop %v1112
    %v1114 = vmul.f32 1.0, %v1113
    %v1115 = vmul.f32 %v1114, %v993
    %v1116 = vtanh.pop %v1108
    %1118 = vrot.lane.b32.xlu0 %v1116, 32
    %v1119 = vpop.permute.xlu0 %1118
    %v1121 = vmul.f32 %v1114, %v1119
    %1123 = vrot.lane.b32.xlu0 %v1121, 32
    %v1124 = vpop.permute.xlu0 %1123
    %v1126 = vadd.f32 %v1115, %v1124
    %v1127 = vtanh.pop %v1126
    %1129 = vrot.lane.b32.xlu0 %v1127, 32
    %v1130 = vpop.permute.xlu0 %1129
    %v1132 = vmul.f32 %v1114, %v1130
    %v1133 = vadd.f32 %v1106, %v189
    %v1134 = vxor.u32 %v1133, 2147483648
    %v1135 = vmul.f32 %v1134, 1.442695
    %v1136 = vpow.pop %v1135
    %v1137 = vadd.f32 %v1136, 1.0
    %v1138 = vrcp.pop %v1137
    %v1139 = vmul.f32 1.0, %v1138
    %v1140 = vmul.f32 %v1139, %v1018
    %v1141 = vtanh.pop %v1133
    %1143 = vrot.lane.b32.xlu0 %v1141, 32
    %v1144 = vpop.permute.xlu0 %1143
    %v1146 = vmul.f32 %v1139, %v1144
    %1148 = vrot.lane.b32.xlu0 %v1146, 32
    %v1149 = vpop.permute.xlu0 %1148
    %v1151 = vadd.f32 %v1140, %v1149
    %v1152 = vtanh.pop %v1151
    %1154 = vrot.lane.b32.xlu0 %v1152, 32
    %v1155 = vpop.permute.xlu0 %1154
    %v1157 = vmul.f32 %v1139, %v1155
    %1159 = vrot.lane.b32.xlu0 %v1157, 64
    %v1160 = vpop.permute.xlu0 %1159
    %1163 = vrot.lane.b32.xlu0 %v1132, 96
    %v1164 = vpop.permute.xlu0 %1163
    %v1166 = vsel %vm233, %v1160, %v1164
    %v1168 = vsel %vm235, %v1166, 0
    %1170 = vmatprep.subr.mxu0 %v45
    %1171 = vmatpush1.msra.mxu0 %v44
    %1172 = vmatprep.subr.mxu0 %v47
    %1173 = vmatpush1.msra.mxu0 %v46
    %1174 = vmatprep.subr.mxu0 %v49
    %1175 = vmatpush1.msra.mxu0 %v48
    %1176 = vmatprep.subr.mxu0 %v51
    %1177 = vmatpush1.msra.mxu0 %v50
    %1178 = vmatprep.subr.mxu0 %v53
    %1179 = vmatpush1.msra.mxu0 %v52
    %1180 = vmatprep.subr.mxu0 %v55
    %1181 = vmatpush1.msra.mxu0 %v54
    %1182 = vmatprep.subr.mxu0 %v57
    %1183 = vmatpush1.msra.mxu0 %v56
    %1184 = vmatprep.subr.mxu0 %v59
    %1185 = vmatpush1.msra.mxu0 %v58
    %1186 = vmatprep.subr.mxu0 0.0
    %1187 = vmatpush1.msra.mxu0 0.0
    %1188 = vmatprep.subr.mxu0 0.0
    %1189 = vmatpush1.msra.mxu0 0.0
    %1190 = vmatprep.subr.mxu0 0.0
    %1191 = vmatpush1.msra.mxu0 0.0
    %1192 = vmatprep.subr.mxu0 0.0
    %1193 = vmatpush1.msra.mxu0 0.0
    %1194 = vmatprep.subr.mxu0 0.0
    %1195 = vmatpush1.msra.mxu0 0.0
    %1196 = vmatprep.subr.mxu0 0.0
    %1197 = vmatpush1.msra.mxu0 0.0
    %1198 = vmatprep.subr.mxu0 0.0
    %1199 = vmatpush1.msra.mxu0 0.0
    %1200 = vmatprep.subr.mxu0 0.0
    %1201 = vmatpush1.msra.mxu0 0.0
    %1202 = vmatprep.subr.mxu0 0.0
    %1203 = vmatpush1.msra.mxu0 0.0
    %1204 = vmatprep.subr.mxu0 0.0
    %1205 = vmatpush1.msra.mxu0 0.0
    %1206 = vmatprep.subr.mxu0 0.0
    %1207 = vmatpush1.msra.mxu0 0.0
    %1208 = vmatprep.subr.mxu0 0.0
    %1209 = vmatpush1.msra.mxu0 0.0
    %1210 = vmatprep.subr.mxu0 0.0
    %1211 = vmatpush1.msra.mxu0 0.0
    %1212 = vmatprep.subr.mxu0 0.0
    %1213 = vmatpush1.msra.mxu0 0.0
    %1214 = vmatprep.subr.mxu0 0.0
    %1215 = vmatpush1.msra.mxu0 0.0
    %1216 = vmatprep.subr.mxu0 0.0
    %1217 = vmatpush1.msra.mxu0 0.0
    %1218 = vmatprep.subr.mxu0 0.0
    %1219 = vmatpush1.msra.mxu0 0.0
    %1220 = vmatprep.subr.mxu0 0.0
    %1221 = vmatpush1.msra.mxu0 0.0
    %1222 = vmatprep.subr.mxu0 0.0
    %1223 = vmatpush1.msra.mxu0 0.0
    %1224 = vmatprep.subr.mxu0 0.0
    %1225 = vmatpush1.msra.mxu0 0.0
    %1226 = vmatprep.subr.mxu0 0.0
    %1227 = vmatpush1.msra.mxu0 0.0
    %1228 = vmatprep.subr.mxu0 0.0
    %1229 = vmatpush1.msra.mxu0 0.0
    %1230 = vmatprep.subr.mxu0 0.0
    %1231 = vmatpush1.msra.mxu0 0.0
    %1232 = vmatprep.subr.mxu0 0.0
    %1233 = vmatpush1.msra.mxu0 0.0
    %1234 = vmatprep.mubr.f32.mxu0 0.0
    %1235 = vmatmul.mubr.f32.gmra.mrb[0].mxu0 %v1168
    %v1236 = vpop.f32.mrb[0].mxu0
    %v1237 = vadd.f32 0.0, %v1236
    %v1238 = vpop.f32.mrb[0].mxu0
    %1239 = vdwg.mxu0
    %v1240 = vadd.f32 %v1237, %v60
    %v1241 = vxor.u32 %v1240, 2147483648
    %v1242 = vmul.f32 %v1241, 1.442695
    %v1243 = vpow.pop %v1242
    %v1244 = vadd.f32 %v1243, 1.0
    %v1245 = vrcp.pop %v1244
    %v1246 = vmul.f32 1.0, %v1245
    %v1247 = vmul.f32 %v1246, %v1126
    %v1248 = vtanh.pop %v1240
    %1250 = vrot.lane.b32.xlu0 %v1248, 32
    %v1251 = vpop.permute.xlu0 %1250
    %v1253 = vmul.f32 %v1246, %v1251
    %1255 = vrot.lane.b32.xlu0 %v1253, 32
    %v1256 = vpop.permute.xlu0 %1255
    %v1258 = vadd.f32 %v1247, %v1256
    %v1259 = vtanh.pop %v1258
    %1261 = vrot.lane.b32.xlu0 %v1259, 32
    %v1262 = vpop.permute.xlu0 %1261
    %v1264 = vmul.f32 %v1246, %v1262
    %1266 = vrot.lane.b32.xlu0 %v1264, 64
    %v1267 = vpop.permute.xlu0 %1266
    %v1268 = vsel %vm233, %v1267, 0
    %1270 = vmatprep.subr.mxu0 0.0
    %1271 = vmatpush1.msra.mxu0 %v61
    %1272 = vmatprep.subr.mxu0 0.0
    %1273 = vmatpush1.msra.mxu0 %v62
    %1274 = vmatprep.subr.mxu0 0.0
    %1275 = vmatpush1.msra.mxu0 %v63
    %1276 = vmatprep.subr.mxu0 0.0
    %1277 = vmatpush1.msra.mxu0 %v64
    %1278 = vmatprep.subr.mxu0 0.0
    %1279 = vmatpush1.msra.mxu0 0.0
    %1280 = vmatprep.subr.mxu0 0.0
    %1281 = vmatpush1.msra.mxu0 0.0
    %1282 = vmatprep.subr.mxu0 0.0
    %1283 = vmatpush1.msra.mxu0 0.0
    %1284 = vmatprep.subr.mxu0 0.0
    %1285 = vmatpush1.msra.mxu0 0.0
    %1286 = vmatprep.subr.mxu0 0.0
    %1287 = vmatpush1.msra.mxu0 0.0
    %1288 = vmatprep.subr.mxu0 0.0
    %1289 = vmatpush1.msra.mxu0 0.0
    %1290 = vmatprep.subr.mxu0 0.0
    %1291 = vmatpush1.msra.mxu0 0.0
    %1292 = vmatprep.subr.mxu0 0.0
    %1293 = vmatpush1.msra.mxu0 0.0
    %1294 = vmatprep.subr.mxu0 0.0
    %1295 = vmatpush1.msra.mxu0 0.0
    %1296 = vmatprep.subr.mxu0 0.0
    %1297 = vmatpush1.msra.mxu0 0.0
    %1298 = vmatprep.subr.mxu0 0.0
    %1299 = vmatpush1.msra.mxu0 0.0
    %1300 = vmatprep.subr.mxu0 0.0
    %1301 = vmatpush1.msra.mxu0 0.0
    %1302 = vmatprep.subr.mxu0 0.0
    %1303 = vmatpush1.msra.mxu0 0.0
    %1304 = vmatprep.subr.mxu0 0.0
    %1305 = vmatpush1.msra.mxu0 0.0
    %1306 = vmatprep.subr.mxu0 0.0
    %1307 = vmatpush1.msra.mxu0 0.0
    %1308 = vmatprep.subr.mxu0 0.0
    %1309 = vmatpush1.msra.mxu0 0.0
    %1310 = vmatprep.subr.mxu0 0.0
    %1311 = vmatpush1.msra.mxu0 0.0
    %1312 = vmatprep.subr.mxu0 0.0
    %1313 = vmatpush1.msra.mxu0 0.0
    %1314 = vmatprep.subr.mxu0 0.0
    %1315 = vmatpush1.msra.mxu0 0.0
    %1316 = vmatprep.subr.mxu0 0.0
    %1317 = vmatpush1.msra.mxu0 0.0
    %1318 = vmatprep.subr.mxu0 0.0
    %1319 = vmatpush1.msra.mxu0 0.0
    %1320 = vmatprep.subr.mxu0 0.0
    %1321 = vmatpush1.msra.mxu0 0.0
    %1322 = vmatprep.subr.mxu0 0.0
    %1323 = vmatpush1.msra.mxu0 0.0
    %1324 = vmatprep.subr.mxu0 0.0
    %1325 = vmatpush1.msra.mxu0 0.0
    %1326 = vmatprep.subr.mxu0 0.0
    %1327 = vmatpush1.msra.mxu0 0.0
    %1328 = vmatprep.subr.mxu0 0.0
    %1329 = vmatpush1.msra.mxu0 0.0
    %1330 = vmatprep.subr.mxu0 0.0
    %1331 = vmatpush1.msra.mxu0 0.0
    %1332 = vmatprep.subr.mxu0 0.0
    %1333 = vmatpush1.msra.mxu0 0.0
    %1334 = vmatprep.mubr.f32.mxu0 0.0
    %1335 = vmatmul.mubr.f32.gmra.mrb[0].mxu0 %v1268
    %v1336 = vpop.f32.mrb[0].mxu0
    %v1337 = vadd.f32 %v65, %v1336
    %v1338 = vpop.f32.mrb[0].mxu0
    %1339 = vdwg.mxu0
    %vm1340 = vcmask 25600
    %1341 = vst.msk [vmem:[#allocation7] sm:$0x3] %vm1340, %v1337
    // Predicated region
    $region18: #{tpu_custom_call.1} parent=1 // pred_check
      _
    $region19: #{tpu_custom_call.1} parent=1 // pred_check_branch
      %1343 = sbr.rel (0) target = $region21
    $region20: #{tpu_custom_call.1} parent=1 // pred_region
      %s1345 = ssub.s32 32, 32
      %1346 = vsyncadd [#allocation4], %s1345
      %s1348 = sshll.u32 [#allocation7], 4
      %s1349 = int_to_ptr.vmem [resolvable:$true] %s1348
      %1351 = dma.vmem_to_hbm [thread:$0]  %s1349, 32, %s2, [#allocation4]
    $region21: #{tpu_custom_call.1} parent=1 // pred_fallthru
      _
    // Predicated region
    $region22: #{tpu_custom_call.1} parent=1 // pred_check
      _
    $region23: #{tpu_custom_call.1} parent=1 // pred_check_branch
      %1353 = sbr.rel (0) target = $region25
    $region24: #{tpu_custom_call.1} parent=1 // pred_region
      %1354 = dma.done [#allocation4], 32
    $region25: #{tpu_custom_call.1} parent=1 // pred_fallthru
      _
    %1355 = vsyncpa [#allocation3], 1
    %1356 = vsyncpa [#allocation6], 1
    %1357 = vsyncpa [#allocation4], 1

</llo_original>
